<compile_context>
chip_gen: v5e
topology: v5e:2x2
jax: 0.10.0
libtpu: 0.0.40
codegen_flags: <defaults>
</compile_context>

<pallas_src>
import jax
import jax.numpy as jnp
from jax import lax
from jax.experimental import pallas as pl
from jax.experimental.pallas import tpu as pltpu

EPS = 1e-5


def _make_basic_block_kernel(N, H, W, C, PAD):
    M = N * H * W

    def kernel(x_ref, w1_ref, g1_ref, b1_ref, w2_ref, g2_ref, b2_ref, m_ref,
               o_ref, buf_ref, im2col_ref):
        # x_ref      : (C, M)           channel-major activations
        # w*_ref     : (C, 9*C)         im2col-packed conv weights
        # g*/b*_ref  : (C, 1)           BN gamma / beta
        # m_ref      : (9, M)           {0,1} boundary mask per 3x3 tap
        # o_ref      : (C, M)
        # buf_ref    : (C, M + 2*PAD)   halo buffer, conv input at [PAD, PAD+M)
        # im2col_ref : (9*C, M)         packed shifted taps for the single matmul

        # Zero only the two halo strips, once; they stay zero for both convs
        # (the interior rewrites below never touch them).
        buf_ref[:, :PAD] = jnp.zeros((C, PAD), jnp.float32)
        buf_ref[:, PAD + M:PAD + M + PAD] = jnp.zeros((C, PAD), jnp.float32)

        def conv3x3(w_ref):
            # 3x3 / stride-1 / pad-1 conv of whatever sits in buf_ref interior:
            # 9 contiguous lane-window loads (masked at image / row boundaries)
            # packed into im2col, then ONE MXU matmul (K = 9*C).
            t = 0
            for dy in range(3):
                for dx in range(3):
                    shift = (dy - 1) * W + (dx - 1)
                    tap = buf_ref[:, PAD + shift:PAD + shift + M]      # (C, M)
                    im2col_ref[t * C:(t + 1) * C, :] = tap * m_ref[t:t + 1, :]
                    t += 1
            return jnp.dot(w_ref[...], im2col_ref[...],                # (C, M)
                           preferred_element_type=jnp.float32)

        def batchnorm(h, g_ref, b_ref):
            # Training-mode BN, single fused pass: per-channel (= per-row)
            # sum and sum-of-squares over the lane axis, f32 accumulation.
            inv_m = 1.0 / M
            mu = jnp.sum(h, axis=1, keepdims=True) * inv_m             # (C, 1)
            ex2 = jnp.sum(h * h, axis=1, keepdims=True) * inv_m        # (C, 1)
            var = ex2 - mu * mu
            scale = g_ref[...] * lax.rsqrt(var + EPS)                  # EUP
            return h * scale + (b_ref[...] - mu * scale)

        # ---- conv1 -> bn1 -> relu ----------------------------------------
        buf_ref[:, PAD:PAD + M] = x_ref[...]
        h1 = jnp.maximum(batchnorm(conv3x3(w1_ref), g1_ref, b1_ref), 0.0)

        # ---- conv2 -> bn2 --------------------------------------------------
        buf_ref[:, PAD:PAD + M] = h1
        h2 = batchnorm(conv3x3(w2_ref), g2_ref, b2_ref)

        # ---- residual add + relu (full lane-width store) -------------------
        o_ref[...] = jnp.maximum(h2 + x_ref[...], 0.0)

    return kernel


def _boundary_masks(N, H, W):
    # {0,1} per 3x3 tap over the flattened (n, y, x) index: 1 where the shifted
    # read stays inside the same image's row/column range (i.e. positions the
    # conv would NOT read from zero padding).  Pure function of shapes.
    m = jnp.arange(N * H * W, dtype=jnp.int32)
    y = (m // W) % H
    x = m % W
    masks = []
    for dy in (-1, 0, 1):
        for dx in (-1, 0, 1):
            ok = (y + dy >= 0) & (y + dy < H) & (x + dx >= 0) & (x + dx < W)
            masks.append(ok)
    return jnp.stack(masks).astype(jnp.float32)                 # (9, N*H*W)


def basic_block(x_nchw, w1_oihw, g1, b1, w2_oihw, g2, b2):
    """PyTorch-facing wrapper: NCHW activations, OIHW conv weights, (C,) BN."""
    N, C, H, W = x_nchw.shape
    M = N * H * W
    PAD = ((W + 1 + 127) // 128) * 128          # lane-tile-aligned halo >= W+1

    # ---- layout glue only (wrapper-side transposes / reshapes are free) ----
    x_cm = jnp.transpose(x_nchw, (1, 0, 2, 3)).reshape(C, M)            # (C, M)
    w1_m = jnp.transpose(w1_oihw, (0, 2, 3, 1)).reshape(C, 9 * C)       # (C, 9C)
    w2_m = jnp.transpose(w2_oihw, (0, 2, 3, 1)).reshape(C, 9 * C)
    g1_c, b1_c = g1.reshape(C, 1), b1.reshape(C, 1)
    g2_c, b2_c = g2.reshape(C, 1), b2.reshape(C, 1)
    masks = _boundary_masks(N, H, W)                                     # (9, M)

    kernel = _make_basic_block_kernel(N, H, W, C, PAD)
    vmem = pl.BlockSpec(memory_space=pltpu.MemorySpace.VMEM)

    # TODO(synk): for production ResNet shapes (e.g. N=32, H=W=56, C=64) add a
    # halo-tiled grid over (N, H) with a cross-tile (two-pass) reduction for
    # the batch-statistic BN so the working set fits v7x's 64 MiB VMEM and the
    # batch axis can be marked "parallel" for megacore; at this test size a
    # single resident invocation is the right design.
    out_cm = pl.pallas_call(
        kernel,
        out_shape=jax.ShapeDtypeStruct((C, M), jnp.float32),
        in_specs=[vmem] * 8,
        out_specs=vmem,
        scratch_shapes=[
            pltpu.VMEM((C, M + 2 * PAD), jnp.float32),   # halo buffer
            pltpu.VMEM((9 * C, M), jnp.float32),         # im2col pack
        ],
    )(x_cm, w1_m, g1_c, b1_c, w2_m, g2_c, b2_c, masks)

    return jnp.transpose(out_cm.reshape(C, N, H, W), (1, 0, 2, 3))       # NCHW


# ---------------------------------------------------------------------------
# Pure-JAX reference (NCHW, matches PyTorch exactly) for a correctness check.
def _ref_basic_block_nchw(x, w1, g1, b1, w2, g2, b2):
    def conv(y, w):
        return lax.conv_general_dilated(
            y, w, window_strides=(1, 1), padding=[(1, 1), (1, 1)],
            dimension_numbers=("NCHW", "OIHW", "NCHW"))

    def bn(y, g, b):
        mu = jnp.mean(y, axis=(0, 2, 3), keepdims=True)
        var = jnp.mean((y - mu) ** 2, axis=(0, 2, 3), keepdims=True)
        return (y - mu) * lax.rsqrt(var + EPS) * g.reshape(1, -1, 1, 1) \
            + b.reshape(1, -1, 1, 1)

    h = jax.nn.relu(bn(conv(x, w1), g1, b1))
    h = bn(conv(h, w2), g2, b2)
    return jax.nn.relu(h + x)


if __name__ == "__main__":
    key = jax.random.PRNGKey(0)
    k_x, k_w1, k_w2, k_g1, k_b1, k_g2, k_b2 = jax.random.split(key, 7)

    N, C, H, W = 2, 4, 16, 16                    # in_channel == out_channel
    x_nchw = jax.random.normal(k_x, (N, C, H, W), jnp.float32)

    # Torch-shaped synthetic parameters: conv OIHW, BN (C,).
    w1 = 0.1 * jax.random.normal(k_w1, (C, C, 3, 3), jnp.float32)
    w2 = 0.1 * jax.random.normal(k_w2, (C, C, 3, 3), jnp.float32)
    g1 = 1.0 + 0.1 * jax.random.normal(k_g1, (C,), jnp.float32)
    b1 = 0.1 * jax.random.normal(k_b1, (C,), jnp.float32)
    g2 = 1.0 + 0.1 * jax.random.normal(k_g2, (C,), jnp.float32)
    b2 = 0.1 * jax.random.normal(k_b2, (C,), jnp.float32)

    out = jax.block_until_ready(basic_block(x_nchw, w1, g1, b1, w2, g2, b2))

    ref = _ref_basic_block_nchw(x_nchw, w1, g1, b1, w2, g2, b2)
    assert out.shape == x_nchw.shape and out.dtype == jnp.float32
    err = float(jnp.max(jnp.abs(out - ref)))
    assert err < 1e-3, f"max abs err {err}"

    print("KERNEL_OK")
</pallas_src>

<mosaic_0001>
module attributes {stable_mosaic.version = 11 : i64} {
  func.func @kernel(%arg0: memref<4x512xf32, #tpu.memory_space<vmem>>, %arg1: memref<4x36xf32, #tpu.memory_space<vmem>>, %arg2: memref<4x1xf32, #tpu.memory_space<vmem>>, %arg3: memref<4x1xf32, #tpu.memory_space<vmem>>, %arg4: memref<4x36xf32, #tpu.memory_space<vmem>>, %arg5: memref<4x1xf32, #tpu.memory_space<vmem>>, %arg6: memref<4x1xf32, #tpu.memory_space<vmem>>, %arg7: memref<9x512xf32, #tpu.memory_space<vmem>>, %arg8: memref<4x512xf32, #tpu.memory_space<vmem>>, %arg9: memref<4x768xf32, #tpu.memory_space<vmem>>, %arg10: memref<36x512xf32, #tpu.memory_space<vmem>>) attributes {dimension_semantics = [], scalar_prefetch = 0 : i64, scratch_operands = 2 : i64, tpu.core_type = #tpu.core_type<tc>} {
    %cst = arith.constant 0.000000e+00 : f32
    %0 = vector.broadcast %cst : f32 to vector<4x128xf32>
    %c0 = arith.constant 0 : index
    %c0_0 = arith.constant 0 : index
    %1 = vector.load %arg9[%c0, %c0_0] : memref<4x768xf32, #tpu.memory_space<vmem>>, vector<4x128xf32>
    tpu.vector_store %arg9[%c0, %c0_0], %0 {strides = array<i32>} : memref<4x768xf32, #tpu.memory_space<vmem>>, vector<4x128xf32>,
    %cst_1 = arith.constant 0.000000e+00 : f32
    %2 = vector.broadcast %cst_1 : f32 to vector<4x128xf32>
    %c0_2 = arith.constant 0 : index
    %c640 = arith.constant 640 : index
    %3 = vector.load %arg9[%c0_2, %c640] : memref<4x768xf32, #tpu.memory_space<vmem>>, vector<4x128xf32>
    tpu.vector_store %arg9[%c0_2, %c640], %2 {strides = array<i32>} : memref<4x768xf32, #tpu.memory_space<vmem>>, vector<4x128xf32>,
    %c0_3 = arith.constant 0 : index
    %c0_4 = arith.constant 0 : index
    %4 = vector.load %arg0[%c0_3, %c0_4] : memref<4x512xf32, #tpu.memory_space<vmem>>, vector<4x512xf32>
    %c0_5 = arith.constant 0 : index
    %c128 = arith.constant 128 : index
    %5 = vector.load %arg9[%c0_5, %c128] : memref<4x768xf32, #tpu.memory_space<vmem>>, vector<4x512xf32>
    tpu.vector_store %arg9[%c0_5, %c128], %4 {strides = array<i32>} : memref<4x768xf32, #tpu.memory_space<vmem>>, vector<4x512xf32>,
    %c0_6 = arith.constant 0 : index
    %c111 = arith.constant 111 : index
    %6 = vector.load %arg9[%c0_6, %c111] : memref<4x768xf32, #tpu.memory_space<vmem>>, vector<4x512xf32>
    %c0_7 = arith.constant 0 : index
    %c0_8 = arith.constant 0 : index
    %7 = vector.load %arg7[%c0_7, %c0_8] : memref<9x512xf32, #tpu.memory_space<vmem>>, vector<1x512xf32>
    %8 = vector.broadcast %7 : vector<1x512xf32> to vector<4x512xf32>
    %9 = arith.mulf %6, %8 : vector<4x512xf32>
    %c0_9 = arith.constant 0 : index
    %c0_10 = arith.constant 0 : index
    %10 = vector.load %arg10[%c0_9, %c0_10] : memref<36x512xf32, #tpu.memory_space<vmem>>, vector<4x512xf32>
    tpu.vector_store %arg10[%c0_9, %c0_10], %9 {strides = array<i32>} : memref<36x512xf32, #tpu.memory_space<vmem>>, vector<4x512xf32>,
    %c0_11 = arith.constant 0 : index
    %c112 = arith.constant 112 : index
    %11 = vector.load %arg9[%c0_11, %c112] : memref<4x768xf32, #tpu.memory_space<vmem>>, vector<4x512xf32>
    %c1 = arith.constant 1 : index
    %c0_12 = arith.constant 0 : index
    %12 = vector.load %arg7[%c1, %c0_12] : memref<9x512xf32, #tpu.memory_space<vmem>>, vector<1x512xf32>
    %13 = vector.broadcast %12 : vector<1x512xf32> to vector<4x512xf32>
    %14 = arith.mulf %11, %13 : vector<4x512xf32>
    %c4 = arith.constant 4 : index
    %c0_13 = arith.constant 0 : index
    %15 = vector.load %arg10[%c4, %c0_13] : memref<36x512xf32, #tpu.memory_space<vmem>>, vector<4x512xf32>
    tpu.vector_store %arg10[%c4, %c0_13], %14 {strides = array<i32>} : memref<36x512xf32, #tpu.memory_space<vmem>>, vector<4x512xf32>,
    %c0_14 = arith.constant 0 : index
    %c113 = arith.constant 113 : index
    %16 = vector.load %arg9[%c0_14, %c113] : memref<4x768xf32, #tpu.memory_space<vmem>>, vector<4x512xf32>
    %c2 = arith.constant 2 : index
    %c0_15 = arith.constant 0 : index
    %17 = vector.load %arg7[%c2, %c0_15] : memref<9x512xf32, #tpu.memory_space<vmem>>, vector<1x512xf32>
    %18 = vector.broadcast %17 : vector<1x512xf32> to vector<4x512xf32>
    %19 = arith.mulf %16, %18 : vector<4x512xf32>
    %c8 = arith.constant 8 : index
    %c0_16 = arith.constant 0 : index
    %20 = vector.load %arg10[%c8, %c0_16] : memref<36x512xf32, #tpu.memory_space<vmem>>, vector<4x512xf32>
    tpu.vector_store %arg10[%c8, %c0_16], %19 {strides = array<i32>} : memref<36x512xf32, #tpu.memory_space<vmem>>, vector<4x512xf32>,
    %c0_17 = arith.constant 0 : index
    %c127 = arith.constant 127 : index
    %21 = vector.load %arg9[%c0_17, %c127] : memref<4x768xf32, #tpu.memory_space<vmem>>, vector<4x512xf32>
    %c3 = arith.constant 3 : index
    %c0_18 = arith.constant 0 : index
    %22 = vector.load %arg7[%c3, %c0_18] : memref<9x512xf32, #tpu.memory_space<vmem>>, vector<1x512xf32>
    %23 = vector.broadcast %22 : vector<1x512xf32> to vector<4x512xf32>
    %24 = arith.mulf %21, %23 : vector<4x512xf32>
    %c12 = arith.constant 12 : index
    %c0_19 = arith.constant 0 : index
    %25 = vector.load %arg10[%c12, %c0_19] : memref<36x512xf32, #tpu.memory_space<vmem>>, vector<4x512xf32>
    tpu.vector_store %arg10[%c12, %c0_19], %24 {strides = array<i32>} : memref<36x512xf32, #tpu.memory_space<vmem>>, vector<4x512xf32>,
    %c0_20 = arith.constant 0 : index
    %c128_21 = arith.constant 128 : index
    %26 = vector.load %arg9[%c0_20, %c128_21] : memref<4x768xf32, #tpu.memory_space<vmem>>, vector<4x512xf32>
    %c4_22 = arith.constant 4 : index
    %c0_23 = arith.constant 0 : index
    %27 = vector.load %arg7[%c4_22, %c0_23] : memref<9x512xf32, #tpu.memory_space<vmem>>, vector<1x512xf32>
    %28 = vector.broadcast %27 : vector<1x512xf32> to vector<4x512xf32>
    %29 = arith.mulf %26, %28 : vector<4x512xf32>
    %c16 = arith.constant 16 : index
    %c0_24 = arith.constant 0 : index
    %30 = vector.load %arg10[%c16, %c0_24] : memref<36x512xf32, #tpu.memory_space<vmem>>, vector<4x512xf32>
    tpu.vector_store %arg10[%c16, %c0_24], %29 {strides = array<i32>} : memref<36x512xf32, #tpu.memory_space<vmem>>, vector<4x512xf32>,
    %c0_25 = arith.constant 0 : index
    %c129 = arith.constant 129 : index
    %31 = vector.load %arg9[%c0_25, %c129] : memref<4x768xf32, #tpu.memory_space<vmem>>, vector<4x512xf32>
    %c5 = arith.constant 5 : index
    %c0_26 = arith.constant 0 : index
    %32 = vector.load %arg7[%c5, %c0_26] : memref<9x512xf32, #tpu.memory_space<vmem>>, vector<1x512xf32>
    %33 = vector.broadcast %32 : vector<1x512xf32> to vector<4x512xf32>
    %34 = arith.mulf %31, %33 : vector<4x512xf32>
    %c20 = arith.constant 20 : index
    %c0_27 = arith.constant 0 : index
    %35 = vector.load %arg10[%c20, %c0_27] : memref<36x512xf32, #tpu.memory_space<vmem>>, vector<4x512xf32>
    tpu.vector_store %arg10[%c20, %c0_27], %34 {strides = array<i32>} : memref<36x512xf32, #tpu.memory_space<vmem>>, vector<4x512xf32>,
    %c0_28 = arith.constant 0 : index
    %c143 = arith.constant 143 : index
    %36 = vector.load %arg9[%c0_28, %c143] : memref<4x768xf32, #tpu.memory_space<vmem>>, vector<4x512xf32>
    %c6 = arith.constant 6 : index
    %c0_29 = arith.constant 0 : index
    %37 = vector.load %arg7[%c6, %c0_29] : memref<9x512xf32, #tpu.memory_space<vmem>>, vector<1x512xf32>
    %38 = vector.broadcast %37 : vector<1x512xf32> to vector<4x512xf32>
    %39 = arith.mulf %36, %38 : vector<4x512xf32>
    %c24 = arith.constant 24 : index
    %c0_30 = arith.constant 0 : index
    %40 = vector.load %arg10[%c24, %c0_30] : memref<36x512xf32, #tpu.memory_space<vmem>>, vector<4x512xf32>
    tpu.vector_store %arg10[%c24, %c0_30], %39 {strides = array<i32>} : memref<36x512xf32, #tpu.memory_space<vmem>>, vector<4x512xf32>,
    %c0_31 = arith.constant 0 : index
    %c144 = arith.constant 144 : index
    %41 = vector.load %arg9[%c0_31, %c144] : memref<4x768xf32, #tpu.memory_space<vmem>>, vector<4x512xf32>
    %c7 = arith.constant 7 : index
    %c0_32 = arith.constant 0 : index
    %42 = vector.load %arg7[%c7, %c0_32] : memref<9x512xf32, #tpu.memory_space<vmem>>, vector<1x512xf32>
    %43 = vector.broadcast %42 : vector<1x512xf32> to vector<4x512xf32>
    %44 = arith.mulf %41, %43 : vector<4x512xf32>
    %c28 = arith.constant 28 : index
    %c0_33 = arith.constant 0 : index
    %45 = vector.load %arg10[%c28, %c0_33] : memref<36x512xf32, #tpu.memory_space<vmem>>, vector<4x512xf32>
    tpu.vector_store %arg10[%c28, %c0_33], %44 {strides = array<i32>} : memref<36x512xf32, #tpu.memory_space<vmem>>, vector<4x512xf32>,
    %c0_34 = arith.constant 0 : index
    %c145 = arith.constant 145 : index
    %46 = vector.load %arg9[%c0_34, %c145] : memref<4x768xf32, #tpu.memory_space<vmem>>, vector<4x512xf32>
    %c8_35 = arith.constant 8 : index
    %c0_36 = arith.constant 0 : index
    %47 = vector.load %arg7[%c8_35, %c0_36] : memref<9x512xf32, #tpu.memory_space<vmem>>, vector<1x512xf32>
    %48 = vector.broadcast %47 : vector<1x512xf32> to vector<4x512xf32>
    %49 = arith.mulf %46, %48 : vector<4x512xf32>
    %c32 = arith.constant 32 : index
    %c0_37 = arith.constant 0 : index
    %50 = vector.load %arg10[%c32, %c0_37] : memref<36x512xf32, #tpu.memory_space<vmem>>, vector<4x512xf32>
    tpu.vector_store %arg10[%c32, %c0_37], %49 {strides = array<i32>} : memref<36x512xf32, #tpu.memory_space<vmem>>, vector<4x512xf32>,
    %c0_38 = arith.constant 0 : index
    %c0_39 = arith.constant 0 : index
    %51 = vector.load %arg1[%c0_38, %c0_39] : memref<4x36xf32, #tpu.memory_space<vmem>>, vector<4x36xf32>
    %c0_40 = arith.constant 0 : index
    %c0_41 = arith.constant 0 : index
    %52 = vector.load %arg10[%c0_40, %c0_41] : memref<36x512xf32, #tpu.memory_space<vmem>>, vector<36x512xf32>
    %cst_42 = arith.constant dense<0.000000e+00> : vector<4x512xf32>
    %53 = tpu.matmul %51, %52, %cst_42 {dimension_numbers = #tpu.dot_dimension_numbers<[1], [0], [0], [1], [0, 0, 1, 1], [], []>} : vector<4x36xf32>, vector<36x512xf32>, vector<4x512xf32> -> vector<4x512xf32>
    %cst_43 = arith.constant dense<0.000000e+00> : vector<4xf32>
    %54 = vector.multi_reduction <add>, %53, %cst_43 [1] : vector<4x512xf32> to vector<4xf32>
    %55 = vector.shape_cast %54 : vector<4xf32> to vector<4x1xf32>
    %cst_44 = arith.constant 0.001953125 : f32
    %56 = vector.broadcast %cst_44 : f32 to vector<4x1xf32>
    %57 = arith.mulf %55, %56 : vector<4x1xf32>
    %58 = arith.mulf %53, %53 : vector<4x512xf32>
    %cst_45 = arith.constant dense<0.000000e+00> : vector<4xf32>
    %59 = vector.multi_reduction <add>, %58, %cst_45 [1] : vector<4x512xf32> to vector<4xf32>
    %60 = vector.shape_cast %59 : vector<4xf32> to vector<4x1xf32>
    %cst_46 = arith.constant 0.001953125 : f32
    %61 = vector.broadcast %cst_46 : f32 to vector<4x1xf32>
    %62 = arith.mulf %60, %61 : vector<4x1xf32>
    %63 = arith.mulf %57, %57 : vector<4x1xf32>
    %64 = arith.subf %62, %63 : vector<4x1xf32>
    %c0_47 = arith.constant 0 : index
    %c0_48 = arith.constant 0 : index
    %65 = vector.load %arg2[%c0_47, %c0_48] : memref<4x1xf32, #tpu.memory_space<vmem>>, vector<4x1xf32>
    %cst_49 = arith.constant 9.99999974E-6 : f32
    %66 = vector.broadcast %cst_49 : f32 to vector<4x1xf32>
    %67 = arith.addf %64, %66 : vector<4x1xf32>
    %68 = math.rsqrt %67 : vector<4x1xf32>
    %69 = arith.mulf %65, %68 : vector<4x1xf32>
    %70 = vector.broadcast %69 : vector<4x1xf32> to vector<4x512xf32>
    %71 = arith.mulf %53, %70 : vector<4x512xf32>
    %c0_50 = arith.constant 0 : index
    %c0_51 = arith.constant 0 : index
    %72 = vector.load %arg3[%c0_50, %c0_51] : memref<4x1xf32, #tpu.memory_space<vmem>>, vector<4x1xf32>
    %73 = arith.mulf %57, %69 : vector<4x1xf32>
    %74 = arith.subf %72, %73 : vector<4x1xf32>
    %75 = vector.broadcast %74 : vector<4x1xf32> to vector<4x512xf32>
    %76 = arith.addf %71, %75 : vector<4x512xf32>
    %cst_52 = arith.constant 0.000000e+00 : f32
    %77 = vector.broadcast %cst_52 : f32 to vector<4x512xf32>
    %78 = arith.maximumf %76, %77 : vector<4x512xf32>
    %c0_53 = arith.constant 0 : index
    %c128_54 = arith.constant 128 : index
    %79 = vector.load %arg9[%c0_53, %c128_54] : memref<4x768xf32, #tpu.memory_space<vmem>>, vector<4x512xf32>
    tpu.vector_store %arg9[%c0_53, %c128_54], %78 {strides = array<i32>} : memref<4x768xf32, #tpu.memory_space<vmem>>, vector<4x512xf32>,
    %c0_55 = arith.constant 0 : index
    %c111_56 = arith.constant 111 : index
    %80 = vector.load %arg9[%c0_55, %c111_56] : memref<4x768xf32, #tpu.memory_space<vmem>>, vector<4x512xf32>
    %c0_57 = arith.constant 0 : index
    %c0_58 = arith.constant 0 : index
    %81 = vector.load %arg7[%c0_57, %c0_58] : memref<9x512xf32, #tpu.memory_space<vmem>>, vector<1x512xf32>
    %82 = vector.broadcast %81 : vector<1x512xf32> to vector<4x512xf32>
    %83 = arith.mulf %80, %82 : vector<4x512xf32>
    %c0_59 = arith.constant 0 : index
    %c0_60 = arith.constant 0 : index
    %84 = vector.load %arg10[%c0_59, %c0_60] : memref<36x512xf32, #tpu.memory_space<vmem>>, vector<4x512xf32>
    tpu.vector_store %arg10[%c0_59, %c0_60], %83 {strides = array<i32>} : memref<36x512xf32, #tpu.memory_space<vmem>>, vector<4x512xf32>,
    %c0_61 = arith.constant 0 : index
    %c112_62 = arith.constant 112 : index
    %85 = vector.load %arg9[%c0_61, %c112_62] : memref<4x768xf32, #tpu.memory_space<vmem>>, vector<4x512xf32>
    %c1_63 = arith.constant 1 : index
    %c0_64 = arith.constant 0 : index
    %86 = vector.load %arg7[%c1_63, %c0_64] : memref<9x512xf32, #tpu.memory_space<vmem>>, vector<1x512xf32>
    %87 = vector.broadcast %86 : vector<1x512xf32> to vector<4x512xf32>
    %88 = arith.mulf %85, %87 : vector<4x512xf32>
    %c4_65 = arith.constant 4 : index
    %c0_66 = arith.constant 0 : index
    %89 = vector.load %arg10[%c4_65, %c0_66] : memref<36x512xf32, #tpu.memory_space<vmem>>, vector<4x512xf32>
    tpu.vector_store %arg10[%c4_65, %c0_66], %88 {strides = array<i32>} : memref<36x512xf32, #tpu.memory_space<vmem>>, vector<4x512xf32>,
    %c0_67 = arith.constant 0 : index
    %c113_68 = arith.constant 113 : index
    %90 = vector.load %arg9[%c0_67, %c113_68] : memref<4x768xf32, #tpu.memory_space<vmem>>, vector<4x512xf32>
    %c2_69 = arith.constant 2 : index
    %c0_70 = arith.constant 0 : index
    %91 = vector.load %arg7[%c2_69, %c0_70] : memref<9x512xf32, #tpu.memory_space<vmem>>, vector<1x512xf32>
    %92 = vector.broadcast %91 : vector<1x512xf32> to vector<4x512xf32>
    %93 = arith.mulf %90, %92 : vector<4x512xf32>
    %c8_71 = arith.constant 8 : index
    %c0_72 = arith.constant 0 : index
    %94 = vector.load %arg10[%c8_71, %c0_72] : memref<36x512xf32, #tpu.memory_space<vmem>>, vector<4x512xf32>
    tpu.vector_store %arg10[%c8_71, %c0_72], %93 {strides = array<i32>} : memref<36x512xf32, #tpu.memory_space<vmem>>, vector<4x512xf32>,
    %c0_73 = arith.constant 0 : index
    %c127_74 = arith.constant 127 : index
    %95 = vector.load %arg9[%c0_73, %c127_74] : memref<4x768xf32, #tpu.memory_space<vmem>>, vector<4x512xf32>
    %c3_75 = arith.constant 3 : index
    %c0_76 = arith.constant 0 : index
    %96 = vector.load %arg7[%c3_75, %c0_76] : memref<9x512xf32, #tpu.memory_space<vmem>>, vector<1x512xf32>
    %97 = vector.broadcast %96 : vector<1x512xf32> to vector<4x512xf32>
    %98 = arith.mulf %95, %97 : vector<4x512xf32>
    %c12_77 = arith.constant 12 : index
    %c0_78 = arith.constant 0 : index
    %99 = vector.load %arg10[%c12_77, %c0_78] : memref<36x512xf32, #tpu.memory_space<vmem>>, vector<4x512xf32>
    tpu.vector_store %arg10[%c12_77, %c0_78], %98 {strides = array<i32>} : memref<36x512xf32, #tpu.memory_space<vmem>>, vector<4x512xf32>,
    %c0_79 = arith.constant 0 : index
    %c128_80 = arith.constant 128 : index
    %100 = vector.load %arg9[%c0_79, %c128_80] : memref<4x768xf32, #tpu.memory_space<vmem>>, vector<4x512xf32>
    %c4_81 = arith.constant 4 : index
    %c0_82 = arith.constant 0 : index
    %101 = vector.load %arg7[%c4_81, %c0_82] : memref<9x512xf32, #tpu.memory_space<vmem>>, vector<1x512xf32>
    %102 = vector.broadcast %101 : vector<1x512xf32> to vector<4x512xf32>
    %103 = arith.mulf %100, %102 : vector<4x512xf32>
    %c16_83 = arith.constant 16 : index
    %c0_84 = arith.constant 0 : index
    %104 = vector.load %arg10[%c16_83, %c0_84] : memref<36x512xf32, #tpu.memory_space<vmem>>, vector<4x512xf32>
    tpu.vector_store %arg10[%c16_83, %c0_84], %103 {strides = array<i32>} : memref<36x512xf32, #tpu.memory_space<vmem>>, vector<4x512xf32>,
    %c0_85 = arith.constant 0 : index
    %c129_86 = arith.constant 129 : index
    %105 = vector.load %arg9[%c0_85, %c129_86] : memref<4x768xf32, #tpu.memory_space<vmem>>, vector<4x512xf32>
    %c5_87 = arith.constant 5 : index
    %c0_88 = arith.constant 0 : index
    %106 = vector.load %arg7[%c5_87, %c0_88] : memref<9x512xf32, #tpu.memory_space<vmem>>, vector<1x512xf32>
    %107 = vector.broadcast %106 : vector<1x512xf32> to vector<4x512xf32>
    %108 = arith.mulf %105, %107 : vector<4x512xf32>
    %c20_89 = arith.constant 20 : index
    %c0_90 = arith.constant 0 : index
    %109 = vector.load %arg10[%c20_89, %c0_90] : memref<36x512xf32, #tpu.memory_space<vmem>>, vector<4x512xf32>
    tpu.vector_store %arg10[%c20_89, %c0_90], %108 {strides = array<i32>} : memref<36x512xf32, #tpu.memory_space<vmem>>, vector<4x512xf32>,
    %c0_91 = arith.constant 0 : index
    %c143_92 = arith.constant 143 : index
    %110 = vector.load %arg9[%c0_91, %c143_92] : memref<4x768xf32, #tpu.memory_space<vmem>>, vector<4x512xf32>
    %c6_93 = arith.constant 6 : index
    %c0_94 = arith.constant 0 : index
    %111 = vector.load %arg7[%c6_93, %c0_94] : memref<9x512xf32, #tpu.memory_space<vmem>>, vector<1x512xf32>
    %112 = vector.broadcast %111 : vector<1x512xf32> to vector<4x512xf32>
    %113 = arith.mulf %110, %112 : vector<4x512xf32>
    %c24_95 = arith.constant 24 : index
    %c0_96 = arith.constant 0 : index
    %114 = vector.load %arg10[%c24_95, %c0_96] : memref<36x512xf32, #tpu.memory_space<vmem>>, vector<4x512xf32>
    tpu.vector_store %arg10[%c24_95, %c0_96], %113 {strides = array<i32>} : memref<36x512xf32, #tpu.memory_space<vmem>>, vector<4x512xf32>,
    %c0_97 = arith.constant 0 : index
    %c144_98 = arith.constant 144 : index
    %115 = vector.load %arg9[%c0_97, %c144_98] : memref<4x768xf32, #tpu.memory_space<vmem>>, vector<4x512xf32>
    %c7_99 = arith.constant 7 : index
    %c0_100 = arith.constant 0 : index
    %116 = vector.load %arg7[%c7_99, %c0_100] : memref<9x512xf32, #tpu.memory_space<vmem>>, vector<1x512xf32>
    %117 = vector.broadcast %116 : vector<1x512xf32> to vector<4x512xf32>
    %118 = arith.mulf %115, %117 : vector<4x512xf32>
    %c28_101 = arith.constant 28 : index
    %c0_102 = arith.constant 0 : index
    %119 = vector.load %arg10[%c28_101, %c0_102] : memref<36x512xf32, #tpu.memory_space<vmem>>, vector<4x512xf32>
    tpu.vector_store %arg10[%c28_101, %c0_102], %118 {strides = array<i32>} : memref<36x512xf32, #tpu.memory_space<vmem>>, vector<4x512xf32>,
    %c0_103 = arith.constant 0 : index
    %c145_104 = arith.constant 145 : index
    %120 = vector.load %arg9[%c0_103, %c145_104] : memref<4x768xf32, #tpu.memory_space<vmem>>, vector<4x512xf32>
    %c8_105 = arith.constant 8 : index
    %c0_106 = arith.constant 0 : index
    %121 = vector.load %arg7[%c8_105, %c0_106] : memref<9x512xf32, #tpu.memory_space<vmem>>, vector<1x512xf32>
    %122 = vector.broadcast %121 : vector<1x512xf32> to vector<4x512xf32>
    %123 = arith.mulf %120, %122 : vector<4x512xf32>
    %c32_107 = arith.constant 32 : index
    %c0_108 = arith.constant 0 : index
    %124 = vector.load %arg10[%c32_107, %c0_108] : memref<36x512xf32, #tpu.memory_space<vmem>>, vector<4x512xf32>
    tpu.vector_store %arg10[%c32_107, %c0_108], %123 {strides = array<i32>} : memref<36x512xf32, #tpu.memory_space<vmem>>, vector<4x512xf32>,
    %c0_109 = arith.constant 0 : index
    %c0_110 = arith.constant 0 : index
    %125 = vector.load %arg4[%c0_109, %c0_110] : memref<4x36xf32, #tpu.memory_space<vmem>>, vector<4x36xf32>
    %c0_111 = arith.constant 0 : index
    %c0_112 = arith.constant 0 : index
    %126 = vector.load %arg10[%c0_111, %c0_112] : memref<36x512xf32, #tpu.memory_space<vmem>>, vector<36x512xf32>
    %cst_113 = arith.constant dense<0.000000e+00> : vector<4x512xf32>
    %127 = tpu.matmul %125, %126, %cst_113 {dimension_numbers = #tpu.dot_dimension_numbers<[1], [0], [0], [1], [0, 0, 1, 1], [], []>} : vector<4x36xf32>, vector<36x512xf32>, vector<4x512xf32> -> vector<4x512xf32>
    %cst_114 = arith.constant dense<0.000000e+00> : vector<4xf32>
    %128 = vector.multi_reduction <add>, %127, %cst_114 [1] : vector<4x512xf32> to vector<4xf32>
    %129 = vector.shape_cast %128 : vector<4xf32> to vector<4x1xf32>
    %cst_115 = arith.constant 0.001953125 : f32
    %130 = vector.broadcast %cst_115 : f32 to vector<4x1xf32>
    %131 = arith.mulf %129, %130 : vector<4x1xf32>
    %132 = arith.mulf %127, %127 : vector<4x512xf32>
    %cst_116 = arith.constant dense<0.000000e+00> : vector<4xf32>
    %133 = vector.multi_reduction <add>, %132, %cst_116 [1] : vector<4x512xf32> to vector<4xf32>
    %134 = vector.shape_cast %133 : vector<4xf32> to vector<4x1xf32>
    %cst_117 = arith.constant 0.001953125 : f32
    %135 = vector.broadcast %cst_117 : f32 to vector<4x1xf32>
    %136 = arith.mulf %134, %135 : vector<4x1xf32>
    %137 = arith.mulf %131, %131 : vector<4x1xf32>
    %138 = arith.subf %136, %137 : vector<4x1xf32>
    %c0_118 = arith.constant 0 : index
    %c0_119 = arith.constant 0 : index
    %139 = vector.load %arg5[%c0_118, %c0_119] : memref<4x1xf32, #tpu.memory_space<vmem>>, vector<4x1xf32>
    %cst_120 = arith.constant 9.99999974E-6 : f32
    %140 = vector.broadcast %cst_120 : f32 to vector<4x1xf32>
    %141 = arith.addf %138, %140 : vector<4x1xf32>
    %142 = math.rsqrt %141 : vector<4x1xf32>
    %143 = arith.mulf %139, %142 : vector<4x1xf32>
    %144 = vector.broadcast %143 : vector<4x1xf32> to vector<4x512xf32>
    %145 = arith.mulf %127, %144 : vector<4x512xf32>
    %c0_121 = arith.constant 0 : index
    %c0_122 = arith.constant 0 : index
    %146 = vector.load %arg6[%c0_121, %c0_122] : memref<4x1xf32, #tpu.memory_space<vmem>>, vector<4x1xf32>
    %147 = arith.mulf %131, %143 : vector<4x1xf32>
    %148 = arith.subf %146, %147 : vector<4x1xf32>
    %149 = vector.broadcast %148 : vector<4x1xf32> to vector<4x512xf32>
    %150 = arith.addf %145, %149 : vector<4x512xf32>
    %c0_123 = arith.constant 0 : index
    %c0_124 = arith.constant 0 : index
    %151 = vector.load %arg0[%c0_123, %c0_124] : memref<4x512xf32, #tpu.memory_space<vmem>>, vector<4x512xf32>
    %152 = arith.addf %150, %151 : vector<4x512xf32>
    %cst_125 = arith.constant 0.000000e+00 : f32
    %153 = vector.broadcast %cst_125 : f32 to vector<4x512xf32>
    %154 = arith.maximumf %152, %153 : vector<4x512xf32>
    %c0_126 = arith.constant 0 : index
    %c0_127 = arith.constant 0 : index
    %155 = vector.load %arg8[%c0_126, %c0_127] : memref<4x512xf32, #tpu.memory_space<vmem>>, vector<4x512xf32>
    tpu.vector_store %arg8[%c0_126, %c0_127], %154 {strides = array<i32>} : memref<4x512xf32, #tpu.memory_space<vmem>>, vector<4x512xf32>,
    return
  }
}

</mosaic_0001>

<llo_original>
// kernel: tpu_custom_call.1
$region0: #{tpu_custom_call.1}
  #allocation0 [shape = 'u32[]', space=smem, size = 0x4, offset = 0x4, fixed_abs, tag = 'smem constant byte address 0x4 - core index']
  #allocation1 [shape = 'u32[72,128]{1,0:T(1,128)}', space=vmem, size = 0x9000, scoped, tag = 'internal scratch']
  #allocation2 [shape = 'f32[4,768]{1,0:T(4,128)}', space=vmem, size = 0x3000, scoped, tag = 'scratch operand']
  #allocation3 [shape = 'f32[36,512]{1,0:T(8,128)}', space=vmem, size = 0x14000, scoped, tag = 'scratch operand']
  %s0 = inlined_call_operand.hbm [shape: f32[4,512], index: 0, kind: input, shape index: {}]
  %s1 = inlined_call_operand.vmem [shape: f32[4,36], index: 1, kind: input, shape index: {}]
  %s2 = inlined_call_operand.vmem [shape: f32[4,1], index: 2, kind: input, shape index: {}]
  %s3 = inlined_call_operand.vmem [shape: f32[4,1], index: 3, kind: input, shape index: {}]
  %s4 = inlined_call_operand.vmem [shape: f32[4,36], index: 4, kind: input, shape index: {}]
  %s5 = inlined_call_operand.vmem [shape: f32[4,1], index: 5, kind: input, shape index: {}]
  %s6 = inlined_call_operand.vmem [shape: f32[4,1], index: 6, kind: input, shape index: {}]
  %s7 = inlined_call_operand.hbm [shape: f32[9,512], index: 7, kind: input, shape index: {}]
  %s8 = inlined_call_operand.hbm [shape: f32[4,512], index: 8, kind: output, shape index: {}]
  %s9 = sld [smem:[#allocation0]]
  $region50: #{tpu_custom_call.1} parent=0
    _
  %s11 = ssub.s32 1, %s9
  %s12 = scalar_select 0, %s11, %s9
  $region1: #{tpu_custom_call.1} parent=0
    #allocation4 [shape = 'u8[8192]{0}', space=vmem, size = 0x2000, scoped, tag = 'input window, operand 0, single buffered']
    #allocation5 [shape = 's32[1]{0}', space=sflag, size = 0x4, scoped, tag = 'scoped memory for tpu_custom_call.1']
    #allocation6 [shape = 's32[1]{0}', space=sflag, size = 0x4, scoped, tag = 'scoped memory for tpu_custom_call.1']
    #allocation7 [shape = 'u8[32768]{0}', space=vmem, size = 0x8000, scoped, tag = 'input window, operand 7, single buffered']
    #allocation8 [shape = 's32[1]{0}', space=sflag, size = 0x4, scoped, tag = 'scoped memory for tpu_custom_call.1']
    #allocation9 [shape = 'u8[8192]{0}', space=vmem, size = 0x2000, scoped, tag = 'output window, operand 0, single buffered']
    %13 = vsyncpa [#allocation5], 0
    %14 = vsyncpa [#allocation8], 0
    %15 = vsyncpa [#allocation6], 0
    // Predicated region
    $region2: #{tpu_custom_call.1} parent=1 // pred_check
      _
    $region3: #{tpu_custom_call.1} parent=1 // pred_check_branch
      %17 = sbr.rel (0) target = $region5
    $region4: #{tpu_custom_call.1} parent=1 // pred_region
      %19 = vsyncadd [#allocation5], 0
      %s21 = sshll.u32 %s0, 4
      %s22 = int_to_ptr.hbm [resolvable:$true] %s21
      %s23 = sshll.u32 [#allocation4], 4
      %s24 = int_to_ptr.vmem [resolvable:$true] %s23
      %26 = dma.hbm_to_vmem [thread:$0]  %s22, 256, %s24, [#allocation5]
    $region5: #{tpu_custom_call.1} parent=1 // pred_fallthru
      _
    // Predicated region
    $region6: #{tpu_custom_call.1} parent=1 // pred_check
      _
    $region7: #{tpu_custom_call.1} parent=1 // pred_check_branch
      %28 = sbr.rel (0) target = $region9
    $region8: #{tpu_custom_call.1} parent=1 // pred_region
      _
    $region9: #{tpu_custom_call.1} parent=1 // pred_fallthru
      _
    // Predicated region
    $region10: #{tpu_custom_call.1} parent=1 // pred_check
      _
    $region11: #{tpu_custom_call.1} parent=1 // pred_check_branch
      %30 = sbr.rel (0) target = $region13
    $region12: #{tpu_custom_call.1} parent=1 // pred_region
      _
    $region13: #{tpu_custom_call.1} parent=1 // pred_fallthru
      _
    // Predicated region
    $region14: #{tpu_custom_call.1} parent=1 // pred_check
      _
    $region15: #{tpu_custom_call.1} parent=1 // pred_check_branch
      %32 = sbr.rel (0) target = $region17
    $region16: #{tpu_custom_call.1} parent=1 // pred_region
      _
    $region17: #{tpu_custom_call.1} parent=1 // pred_fallthru
      _
    // Predicated region
    $region18: #{tpu_custom_call.1} parent=1 // pred_check
      _
    $region19: #{tpu_custom_call.1} parent=1 // pred_check_branch
      %34 = sbr.rel (0) target = $region21
    $region20: #{tpu_custom_call.1} parent=1 // pred_region
      _
    $region21: #{tpu_custom_call.1} parent=1 // pred_fallthru
      _
    // Predicated region
    $region22: #{tpu_custom_call.1} parent=1 // pred_check
      _
    $region23: #{tpu_custom_call.1} parent=1 // pred_check_branch
      %36 = sbr.rel (0) target = $region25
    $region24: #{tpu_custom_call.1} parent=1 // pred_region
      _
    $region25: #{tpu_custom_call.1} parent=1 // pred_fallthru
      _
    // Predicated region
    $region26: #{tpu_custom_call.1} parent=1 // pred_check
      _
    $region27: #{tpu_custom_call.1} parent=1 // pred_check_branch
      %38 = sbr.rel (0) target = $region29
    $region28: #{tpu_custom_call.1} parent=1 // pred_region
      _
    $region29: #{tpu_custom_call.1} parent=1 // pred_fallthru
      _
    // Predicated region
    $region30: #{tpu_custom_call.1} parent=1 // pred_check
      _
    $region31: #{tpu_custom_call.1} parent=1 // pred_check_branch
      %40 = sbr.rel (0) target = $region33
    $region32: #{tpu_custom_call.1} parent=1 // pred_region
      %42 = vsyncadd [#allocation8], 0
      %s43 = sshll.u32 %s7, 4
      %s44 = int_to_ptr.hbm [resolvable:$true] %s43
      %s45 = sshll.u32 [#allocation7], 4
      %s46 = int_to_ptr.vmem [resolvable:$true] %s45
      %51 = dma.hbm_to_vmem [thread:$0]  %s44, 1024, %s46, [#allocation8], 512, 512, 32
    $region33: #{tpu_custom_call.1} parent=1 // pred_fallthru
      _
    // Predicated region
    $region34: #{tpu_custom_call.1} parent=1 // pred_check
      _
    $region35: #{tpu_custom_call.1} parent=1 // pred_check_branch
      %53 = sbr.rel (0) target = $region37
    $region36: #{tpu_custom_call.1} parent=1 // pred_region
      %55 = dma.done [#allocation5], 256
    $region37: #{tpu_custom_call.1} parent=1 // pred_fallthru
      _
    // Predicated region
    $region38: #{tpu_custom_call.1} parent=1 // pred_check
      _
    $region39: #{tpu_custom_call.1} parent=1 // pred_check_branch
      %57 = sbr.rel (0) target = $region41
    $region40: #{tpu_custom_call.1} parent=1 // pred_region
      %59 = dma.done [#allocation8], 1024
    $region41: #{tpu_custom_call.1} parent=1 // pred_fallthru
      _
    %60 = vst [vmem:[#allocation2] sm:$0xf] 0.0
    %61 = vst [vmem:[#allocation2 + $0x14] sm:$0xf] 0.0
    %v62 = vld [vmem:[#allocation4] sm:$0xff]
    %v63 = vld [vmem:[#allocation4 + $0x8] sm:$0xff]
    %64 = vst [vmem:[#allocation2 + $0x4] sm:$0xff] %v62
    %65 = vst [vmem:[#allocation2 + $0xc] sm:$0xff] %v63
    %v66 = vld [vmem:[#allocation2] sm:$0xff]
    %v67 = vld [vmem:[#allocation2 + $0x8] sm:$0xff]
    %v68 = vld [vmem:[#allocation2 + $0x10] sm:$0xf]
    %v69 = vld [vmem:[#allocation7] ss:$8 sm:$0xf]
    %v71 = vperm.slane %v69, 0
    %v72 = vperm.slane %v69, 1
    %v73 = vperm.slane %v69, 2
    %v74 = vperm.slane %v69, 3
    %v75 = vrot.slane %v72, 4
    %v76 = vrot.slane %v74, 4
    %vm77 = vcmask 1043456
    %v78 = vsel %vm77, %v71, %v75
    %v79 = vsel %vm77, %v73, %v76
    %80 = vrot.lane.b32.xlu0 %v78, 111
    %v81 = vpop.permute.xlu0 %80
    %82 = vrot.lane.b32.xlu0 %v79, 111
    %v83 = vpop.permute.xlu0 %82
    %v84 = vrot.slane %v81, 4
    %v85 = vrot.slane %v83, 4
    %vm86 = vcmask 908288
    %v87 = vsel %vm86, %v84, %v81
    %v88 = vsel %vm77, %v84, %v85
    %v89 = vsel %vm86, %v88, %v83
    %v93 = vmul.f32 %v66, %v87
    %v94 = vmul.f32 %v67, %v89
    %v95 = vmul.f32 %v68, %v85
    %99 = vst [vmem:[#allocation1] ss:$2 sm:$0xff] %v93
    %s100 = scalar_lea.vmem [#allocation1], 16
    %101 = vst [vmem:[%s100] ss:$2 sm:$0xff] %v94
    %s102 = scalar_lea.vmem [#allocation1], 32
    %103 = vst [vmem:[%s102] ss:$2 sm:$0xff] %v95
    %v104 = vld.sshfl [vmem:[#allocation1] sm:$0xff pattern:$0x75316420]
    %v105 = vld.sshfl [vmem:[#allocation1 + $0x8] sm:$0xff pattern:$0x75316420]
    %v106 = vld.sshfl [vmem:[#allocation1 + $0x10] sm:$0xff pattern:$0x75316420]
    %v107 = vld.sshfl [vmem:[#allocation1 + $0x18] sm:$0xff pattern:$0x75316420]
    %v108 = vld.sshfl [vmem:[#allocation1 + $0x20] sm:$0xff pattern:$0x75316420]
    %109 = vrot.lane.b32.xlu0 %v104, 17
    %v110 = vpop.permute.xlu0 %109
    %111 = vrot.lane.b32.xlu0 %v105, 17
    %v112 = vpop.permute.xlu0 %111
    %113 = vrot.lane.b32.xlu0 %v106, 17
    %v114 = vpop.permute.xlu0 %113
    %115 = vrot.lane.b32.xlu0 %v107, 17
    %v116 = vpop.permute.xlu0 %115
    %117 = vrot.lane.b32.xlu0 %v108, 17
    %v118 = vpop.permute.xlu0 %117
    %vm119 = vcmask 138240
    %v120 = vsel %vm119, %v110, %v112
    %v121 = vsel %vm119, %v112, %v114
    %v122 = vsel %vm119, %v114, %v116
    %v123 = vsel %vm119, %v116, %v118
    %128 = vst [vmem:[#allocation3] sm:$0xf] %v120
    %129 = vst [vmem:[#allocation3 + $0x8] sm:$0xf] %v121
    %130 = vst [vmem:[#allocation3 + $0x10] sm:$0xf] %v122
    %131 = vst [vmem:[#allocation3 + $0x18] sm:$0xf] %v123
    %v132 = vld [vmem:[#allocation2] sm:$0xff]
    %v133 = vld [vmem:[#allocation2 + $0x8] sm:$0xff]
    %v134 = vld [vmem:[#allocation2 + $0x10] sm:$0xf]
    %s135 = scalar_lea.vmem [#allocation7], 1
    %v136 = vld [vmem:[%s135] ss:$8 sm:$0xf]
    %v138 = vperm.slane %v136, 0
    %v139 = vperm.slane %v136, 1
    %v140 = vperm.slane %v136, 2
    %v141 = vperm.slane %v136, 3
    %v142 = vrot.slane %v139, 4
    %v143 = vrot.slane %v141, 4
    %v144 = vsel %vm77, %v138, %v142
    %v145 = vsel %vm77, %v140, %v143
    %146 = vrot.lane.b32.xlu0 %v144, 112
    %v147 = vpop.permute.xlu0 %146
    %148 = vrot.lane.b32.xlu0 %v145, 112
    %v149 = vpop.permute.xlu0 %148
    %v150 = vrot.slane %v147, 4
    %v151 = vrot.slane %v149, 4
    %vm152 = vcmask 916480
    %v153 = vsel %vm152, %v150, %v147
    %v154 = vsel %vm77, %v150, %v151
    %v155 = vsel %vm152, %v154, %v149
    %v159 = vmul.f32 %v132, %v153
    %v160 = vmul.f32 %v133, %v155
    %v161 = vmul.f32 %v134, %v151
    %s165 = scalar_lea.vmem [#allocation1], 1
    %166 = vst [vmem:[%s165] ss:$2 sm:$0xff] %v159
    %s167 = scalar_lea.vmem [#allocation1], 17
    %168 = vst [vmem:[%s167] ss:$2 sm:$0xff] %v160
    %s169 = scalar_lea.vmem [#allocation1], 33
    %170 = vst [vmem:[%s169] ss:$2 sm:$0xff] %v161
    %v171 = vld.sshfl [vmem:[#allocation1] sm:$0xff pattern:$0x75316420]
    %v172 = vld.sshfl [vmem:[#allocation1 + $0x8] sm:$0xff pattern:$0x75316420]
    %v173 = vld.sshfl [vmem:[#allocation1 + $0x10] sm:$0xff pattern:$0x75316420]
    %v174 = vld.sshfl [vmem:[#allocation1 + $0x18] sm:$0xff pattern:$0x75316420]
    %v175 = vld.sshfl [vmem:[#allocation1 + $0x20] sm:$0xff pattern:$0x75316420]
    %176 = vrot.lane.b32.xlu0 %v171, 16
    %v177 = vpop.permute.xlu0 %176
    %178 = vrot.lane.b32.xlu0 %v172, 16
    %v179 = vpop.permute.xlu0 %178
    %180 = vrot.lane.b32.xlu0 %v173, 16
    %v181 = vpop.permute.xlu0 %180
    %182 = vrot.lane.b32.xlu0 %v174, 16
    %v183 = vpop.permute.xlu0 %182
    %184 = vrot.lane.b32.xlu0 %v175, 16
    %v185 = vpop.permute.xlu0 %184
    %vm186 = vcmask 130048
    %v187 = vsel %vm186, %v177, %v179
    %v188 = vsel %vm186, %v179, %v181
    %v189 = vsel %vm186, %v181, %v183
    %v190 = vsel %vm186, %v183, %v185
    %195 = vst [vmem:[#allocation3] sm:$0xf0] %v187
    %196 = vst [vmem:[#allocation3 + $0x8] sm:$0xf0] %v188
    %197 = vst [vmem:[#allocation3 + $0x10] sm:$0xf0] %v189
    %198 = vst [vmem:[#allocation3 + $0x18] sm:$0xf0] %v190
    %v199 = vld [vmem:[#allocation2] sm:$0xff]
    %v200 = vld [vmem:[#allocation2 + $0x8] sm:$0xff]
    %v201 = vld [vmem:[#allocation2 + $0x10] sm:$0xf]
    %s202 = scalar_lea.vmem [#allocation7], 2
    %v203 = vld [vmem:[%s202] ss:$8 sm:$0xf]
    %v205 = vperm.slane %v203, 0
    %v206 = vperm.slane %v203, 1
    %v207 = vperm.slane %v203, 2
    %v208 = vperm.slane %v203, 3
    %v209 = vrot.slane %v206, 4
    %v210 = vrot.slane %v208, 4
    %v211 = vsel %vm77, %v205, %v209
    %v212 = vsel %vm77, %v207, %v210
    %213 = vrot.lane.b32.xlu0 %v211, 113
    %v214 = vpop.permute.xlu0 %213
    %215 = vrot.lane.b32.xlu0 %v212, 113
    %v216 = vpop.permute.xlu0 %215
    %v217 = vrot.slane %v214, 4
    %v218 = vrot.slane %v216, 4
    %vm219 = vcmask 924672
    %v220 = vsel %vm219, %v217, %v214
    %v221 = vsel %vm77, %v217, %v218
    %v222 = vsel %vm219, %v221, %v216
    %v226 = vmul.f32 %v199, %v220
    %v227 = vmul.f32 %v200, %v222
    %v228 = vmul.f32 %v201, %v218
    %232 = vst [vmem:[#allocation1] ss:$2 sm:$0xff] %v226
    %s233 = scalar_lea.vmem [#allocation1], 16
    %234 = vst [vmem:[%s233] ss:$2 sm:$0xff] %v227
    %s235 = scalar_lea.vmem [#allocation1], 32
    %236 = vst [vmem:[%s235] ss:$2 sm:$0xff] %v228
    %v237 = vld.sshfl [vmem:[#allocation1] sm:$0xff pattern:$0x75316420]
    %v238 = vld.sshfl [vmem:[#allocation1 + $0x8] sm:$0xff pattern:$0x75316420]
    %v239 = vld.sshfl [vmem:[#allocation1 + $0x10] sm:$0xff pattern:$0x75316420]
    %v240 = vld.sshfl [vmem:[#allocation1 + $0x18] sm:$0xff pattern:$0x75316420]
    %v241 = vld.sshfl [vmem:[#allocation1 + $0x20] sm:$0xff pattern:$0x75316420]
    %242 = vrot.lane.b32.xlu0 %v237, 15
    %v243 = vpop.permute.xlu0 %242
    %244 = vrot.lane.b32.xlu0 %v238, 15
    %v245 = vpop.permute.xlu0 %244
    %246 = vrot.lane.b32.xlu0 %v239, 15
    %v247 = vpop.permute.xlu0 %246
    %248 = vrot.lane.b32.xlu0 %v240, 15
    %v249 = vpop.permute.xlu0 %248
    %250 = vrot.lane.b32.xlu0 %v241, 15
    %v251 = vpop.permute.xlu0 %250
    %vm252 = vcmask 121856
    %v253 = vsel %vm252, %v243, %v245
    %v254 = vsel %vm252, %v245, %v247
    %v255 = vsel %vm252, %v247, %v249
    %v256 = vsel %vm252, %v249, %v251
    %261 = vst [vmem:[#allocation3 + $0x20] sm:$0xf] %v253
    %262 = vst [vmem:[#allocation3 + $0x28] sm:$0xf] %v254
    %263 = vst [vmem:[#allocation3 + $0x30] sm:$0xf] %v255
    %264 = vst [vmem:[#allocation3 + $0x38] sm:$0xf] %v256
    %v265 = vld [vmem:[#allocation2] sm:$0xff]
    %v266 = vld [vmem:[#allocation2 + $0x8] sm:$0xff]
    %v267 = vld [vmem:[#allocation2 + $0x10] sm:$0xf]
    %s268 = scalar_lea.vmem [#allocation7], 3
    %v269 = vld [vmem:[%s268] ss:$8 sm:$0xf]
    %v271 = vperm.slane %v269, 0
    %v272 = vperm.slane %v269, 1
    %v273 = vperm.slane %v269, 2
    %v274 = vperm.slane %v269, 3
    %v275 = vrot.slane %v272, 4
    %v276 = vrot.slane %v274, 4
    %v277 = vsel %vm77, %v271, %v275
    %v278 = vsel %vm77, %v273, %v276
    %279 = vrot.lane.b32.xlu0 %v277, 127
    %v280 = vpop.permute.xlu0 %279
    %281 = vrot.lane.b32.xlu0 %v278, 127
    %v282 = vpop.permute.xlu0 %281
    %v283 = vrot.slane %v280, 4
    %v284 = vrot.slane %v282, 4
    %vm285 = vcmask 1039360
    %v286 = vsel %vm285, %v283, %v280
    %v287 = vsel %vm77, %v283, %v284
    %v288 = vsel %vm285, %v287, %v282
    %v292 = vmul.f32 %v265, %v286
    %v293 = vmul.f32 %v266, %v288
    %v294 = vmul.f32 %v267, %v284
    %s298 = scalar_lea.vmem [#allocation1], 1
    %299 = vst [vmem:[%s298] ss:$2 sm:$0xff] %v292
    %s300 = scalar_lea.vmem [#allocation1], 17
    %301 = vst [vmem:[%s300] ss:$2 sm:$0xff] %v293
    %s302 = scalar_lea.vmem [#allocation1], 33
    %303 = vst [vmem:[%s302] ss:$2 sm:$0xff] %v294
    %v304 = vld.sshfl [vmem:[#allocation1] sm:$0xff pattern:$0x75316420]
    %v305 = vld.sshfl [vmem:[#allocation1 + $0x8] sm:$0xff pattern:$0x75316420]
    %v306 = vld.sshfl [vmem:[#allocation1 + $0x10] sm:$0xff pattern:$0x75316420]
    %v307 = vld.sshfl [vmem:[#allocation1 + $0x18] sm:$0xff pattern:$0x75316420]
    %v308 = vld.sshfl [vmem:[#allocation1 + $0x20] sm:$0xff pattern:$0x75316420]
    %309 = vrot.lane.b32.xlu0 %v304, 1
    %v310 = vpop.permute.xlu0 %309
    %311 = vrot.lane.b32.xlu0 %v305, 1
    %v312 = vpop.permute.xlu0 %311
    %313 = vrot.lane.b32.xlu0 %v306, 1
    %v314 = vpop.permute.xlu0 %313
    %315 = vrot.lane.b32.xlu0 %v307, 1
    %v316 = vpop.permute.xlu0 %315
    %317 = vrot.lane.b32.xlu0 %v308, 1
    %v318 = vpop.permute.xlu0 %317
    %vm319 = vcmask 7168
    %v320 = vsel %vm319, %v310, %v312
    %v321 = vsel %vm319, %v312, %v314
    %v322 = vsel %vm319, %v314, %v316
    %v323 = vsel %vm319, %v316, %v318
    %328 = vst [vmem:[#allocation3 + $0x20] sm:$0xf0] %v320
    %329 = vst [vmem:[#allocation3 + $0x28] sm:$0xf0] %v321
    %330 = vst [vmem:[#allocation3 + $0x30] sm:$0xf0] %v322
    %331 = vst [vmem:[#allocation3 + $0x38] sm:$0xf0] %v323
    %v332 = vld [vmem:[#allocation2 + $0x4] sm:$0xff]
    %v333 = vld [vmem:[#allocation2 + $0xc] sm:$0xff]
    %s334 = scalar_lea.vmem [#allocation7], 4
    %v335 = vld [vmem:[%s334] ss:$8 sm:$0xf]
    %v337 = vperm.slane %v335, 0
    %v338 = vperm.slane %v335, 1
    %v339 = vperm.slane %v335, 2
    %v340 = vperm.slane %v335, 3
    %v341 = vrot.slane %v338, 4
    %v342 = vrot.slane %v340, 4
    %v343 = vsel %vm77, %v337, %v341
    %v344 = vsel %vm77, %v339, %v342
    %v347 = vmul.f32 %v332, %v343
    %v348 = vmul.f32 %v333, %v344
    %351 = vst [vmem:[#allocation1] ss:$2 sm:$0xff] %v347
    %s352 = scalar_lea.vmem [#allocation1], 16
    %353 = vst [vmem:[%s352] ss:$2 sm:$0xff] %v348
    %v354 = vld.sshfl [vmem:[#allocation1] sm:$0xff pattern:$0x75316420]
    %v355 = vld.sshfl [vmem:[#allocation1 + $0x8] sm:$0xff pattern:$0x75316420]
    %v356 = vld.sshfl [vmem:[#allocation1 + $0x10] sm:$0xff pattern:$0x75316420]
    %v357 = vld.sshfl [vmem:[#allocation1 + $0x18] sm:$0xff pattern:$0x75316420]
    %362 = vst [vmem:[#allocation3 + $0x40] sm:$0xf] %v354
    %363 = vst [vmem:[#allocation3 + $0x48] sm:$0xf] %v355
    %364 = vst [vmem:[#allocation3 + $0x50] sm:$0xf] %v356
    %365 = vst [vmem:[#allocation3 + $0x58] sm:$0xf] %v357
    %v366 = vld [vmem:[#allocation2 + $0x4] sm:$0xff]
    %v367 = vld [vmem:[#allocation2 + $0xc] sm:$0xff]
    %v368 = vld [vmem:[#allocation2 + $0x14] sm:$0xf]
    %s369 = scalar_lea.vmem [#allocation7], 5
    %v370 = vld [vmem:[%s369] ss:$8 sm:$0xf]
    %v372 = vperm.slane %v370, 0
    %v373 = vperm.slane %v370, 1
    %v374 = vperm.slane %v370, 2
    %v375 = vperm.slane %v370, 3
    %v376 = vrot.slane %v373, 4
    %v377 = vrot.slane %v375, 4
    %v378 = vsel %vm77, %v372, %v376
    %v379 = vsel %vm77, %v374, %v377
    %380 = vrot.lane.b32.xlu0 %v378, 1
    %v381 = vpop.permute.xlu0 %380
    %382 = vrot.lane.b32.xlu0 %v379, 1
    %v383 = vpop.permute.xlu0 %382
    %v384 = vrot.slane %v381, 4
    %v385 = vrot.slane %v383, 4
    %v386 = vsel %vm319, %v384, %v381
    %v387 = vsel %vm77, %v384, %v385
    %v388 = vsel %vm319, %v387, %v383
    %v392 = vmul.f32 %v366, %v386
    %v393 = vmul.f32 %v367, %v388
    %v394 = vmul.f32 %v368, %v385
    %s398 = scalar_lea.vmem [#allocation1], 1
    %399 = vst [vmem:[%s398] ss:$2 sm:$0xff] %v392
    %s400 = scalar_lea.vmem [#allocation1], 17
    %401 = vst [vmem:[%s400] ss:$2 sm:$0xff] %v393
    %s402 = scalar_lea.vmem [#allocation1], 33
    %403 = vst [vmem:[%s402] ss:$2 sm:$0xff] %v394
    %v404 = vld.sshfl [vmem:[#allocation1] sm:$0xff pattern:$0x75316420]
    %v405 = vld.sshfl [vmem:[#allocation1 + $0x8] sm:$0xff pattern:$0x75316420]
    %v406 = vld.sshfl [vmem:[#allocation1 + $0x10] sm:$0xff pattern:$0x75316420]
    %v407 = vld.sshfl [vmem:[#allocation1 + $0x18] sm:$0xff pattern:$0x75316420]
    %v408 = vld.sshfl [vmem:[#allocation1 + $0x20] sm:$0xff pattern:$0x75316420]
    %409 = vrot.lane.b32.xlu0 %v404, 127
    %v410 = vpop.permute.xlu0 %409
    %411 = vrot.lane.b32.xlu0 %v405, 127
    %v412 = vpop.permute.xlu0 %411
    %413 = vrot.lane.b32.xlu0 %v406, 127
    %v414 = vpop.permute.xlu0 %413
    %415 = vrot.lane.b32.xlu0 %v407, 127
    %v416 = vpop.permute.xlu0 %415
    %417 = vrot.lane.b32.xlu0 %v408, 127
    %v418 = vpop.permute.xlu0 %417
    %v419 = vsel %vm285, %v410, %v412
    %v420 = vsel %vm285, %v412, %v414
    %v421 = vsel %vm285, %v414, %v416
    %v422 = vsel %vm285, %v416, %v418
    %427 = vst [vmem:[#allocation3 + $0x40] sm:$0xf0] %v419
    %428 = vst [vmem:[#allocation3 + $0x48] sm:$0xf0] %v420
    %429 = vst [vmem:[#allocation3 + $0x50] sm:$0xf0] %v421
    %430 = vst [vmem:[#allocation3 + $0x58] sm:$0xf0] %v422
    %v431 = vld [vmem:[#allocation2 + $0x4] sm:$0xff]
    %v432 = vld [vmem:[#allocation2 + $0xc] sm:$0xff]
    %v433 = vld [vmem:[#allocation2 + $0x14] sm:$0xf]
    %s434 = scalar_lea.vmem [#allocation7], 6
    %v435 = vld [vmem:[%s434] ss:$8 sm:$0xf]
    %v437 = vperm.slane %v435, 0
    %v438 = vperm.slane %v435, 1
    %v439 = vperm.slane %v435, 2
    %v440 = vperm.slane %v435, 3
    %v441 = vrot.slane %v438, 4
    %v442 = vrot.slane %v440, 4
    %v443 = vsel %vm77, %v437, %v441
    %v444 = vsel %vm77, %v439, %v442
    %445 = vrot.lane.b32.xlu0 %v443, 15
    %v446 = vpop.permute.xlu0 %445
    %447 = vrot.lane.b32.xlu0 %v444, 15
    %v448 = vpop.permute.xlu0 %447
    %v449 = vrot.slane %v446, 4
    %v450 = vrot.slane %v448, 4
    %v451 = vsel %vm252, %v449, %v446
    %v452 = vsel %vm77, %v449, %v450
    %v453 = vsel %vm252, %v452, %v448
    %v457 = vmul.f32 %v431, %v451
    %v458 = vmul.f32 %v432, %v453
    %v459 = vmul.f32 %v433, %v450
    %463 = vst [vmem:[#allocation1] ss:$2 sm:$0xff] %v457
    %s464 = scalar_lea.vmem [#allocation1], 16
    %465 = vst [vmem:[%s464] ss:$2 sm:$0xff] %v458
    %s466 = scalar_lea.vmem [#allocation1], 32
    %467 = vst [vmem:[%s466] ss:$2 sm:$0xff] %v459
    %v468 = vld.sshfl [vmem:[#allocation1] sm:$0xff pattern:$0x75316420]
    %v469 = vld.sshfl [vmem:[#allocation1 + $0x8] sm:$0xff pattern:$0x75316420]
    %v470 = vld.sshfl [vmem:[#allocation1 + $0x10] sm:$0xff pattern:$0x75316420]
    %v471 = vld.sshfl [vmem:[#allocation1 + $0x18] sm:$0xff pattern:$0x75316420]
    %v472 = vld.sshfl [vmem:[#allocation1 + $0x20] sm:$0xff pattern:$0x75316420]
    %473 = vrot.lane.b32.xlu0 %v468, 113
    %v474 = vpop.permute.xlu0 %473
    %475 = vrot.lane.b32.xlu0 %v469, 113
    %v476 = vpop.permute.xlu0 %475
    %477 = vrot.lane.b32.xlu0 %v470, 113
    %v478 = vpop.permute.xlu0 %477
    %479 = vrot.lane.b32.xlu0 %v471, 113
    %v480 = vpop.permute.xlu0 %479
    %481 = vrot.lane.b32.xlu0 %v472, 113
    %v482 = vpop.permute.xlu0 %481
    %v483 = vsel %vm219, %v474, %v476
    %v484 = vsel %vm219, %v476, %v478
    %v485 = vsel %vm219, %v478, %v480
    %v486 = vsel %vm219, %v480, %v482
    %491 = vst [vmem:[#allocation3 + $0x60] sm:$0xf] %v483
    %492 = vst [vmem:[#allocation3 + $0x68] sm:$0xf] %v484
    %493 = vst [vmem:[#allocation3 + $0x70] sm:$0xf] %v485
    %494 = vst [vmem:[#allocation3 + $0x78] sm:$0xf] %v486
    %v495 = vld [vmem:[#allocation2 + $0x4] sm:$0xff]
    %v496 = vld [vmem:[#allocation2 + $0xc] sm:$0xff]
    %v497 = vld [vmem:[#allocation2 + $0x14] sm:$0xf]
    %s498 = scalar_lea.vmem [#allocation7], 7
    %v499 = vld [vmem:[%s498] ss:$8 sm:$0xf]
    %v501 = vperm.slane %v499, 0
    %v502 = vperm.slane %v499, 1
    %v503 = vperm.slane %v499, 2
    %v504 = vperm.slane %v499, 3
    %v505 = vrot.slane %v502, 4
    %v506 = vrot.slane %v504, 4
    %v507 = vsel %vm77, %v501, %v505
    %v508 = vsel %vm77, %v503, %v506
    %509 = vrot.lane.b32.xlu0 %v507, 16
    %v510 = vpop.permute.xlu0 %509
    %511 = vrot.lane.b32.xlu0 %v508, 16
    %v512 = vpop.permute.xlu0 %511
    %v513 = vrot.slane %v510, 4
    %v514 = vrot.slane %v512, 4
    %v515 = vsel %vm186, %v513, %v510
    %v516 = vsel %vm77, %v513, %v514
    %v517 = vsel %vm186, %v516, %v512
    %v521 = vmul.f32 %v495, %v515
    %v522 = vmul.f32 %v496, %v517
    %v523 = vmul.f32 %v497, %v514
    %s527 = scalar_lea.vmem [#allocation1], 1
    %528 = vst [vmem:[%s527] ss:$2 sm:$0xff] %v521
    %s529 = scalar_lea.vmem [#allocation1], 17
    %530 = vst [vmem:[%s529] ss:$2 sm:$0xff] %v522
    %s531 = scalar_lea.vmem [#allocation1], 33
    %532 = vst [vmem:[%s531] ss:$2 sm:$0xff] %v523
    %v533 = vld.sshfl [vmem:[#allocation1] sm:$0xff pattern:$0x75316420]
    %v534 = vld.sshfl [vmem:[#allocation1 + $0x8] sm:$0xff pattern:$0x75316420]
    %v535 = vld.sshfl [vmem:[#allocation1 + $0x10] sm:$0xff pattern:$0x75316420]
    %v536 = vld.sshfl [vmem:[#allocation1 + $0x18] sm:$0xff pattern:$0x75316420]
    %v537 = vld.sshfl [vmem:[#allocation1 + $0x20] sm:$0xff pattern:$0x75316420]
    %538 = vrot.lane.b32.xlu0 %v533, 112
    %v539 = vpop.permute.xlu0 %538
    %540 = vrot.lane.b32.xlu0 %v534, 112
    %v541 = vpop.permute.xlu0 %540
    %542 = vrot.lane.b32.xlu0 %v535, 112
    %v543 = vpop.permute.xlu0 %542
    %544 = vrot.lane.b32.xlu0 %v536, 112
    %v545 = vpop.permute.xlu0 %544
    %546 = vrot.lane.b32.xlu0 %v537, 112
    %v547 = vpop.permute.xlu0 %546
    %v548 = vsel %vm152, %v539, %v541
    %v549 = vsel %vm152, %v541, %v543
    %v550 = vsel %vm152, %v543, %v545
    %v551 = vsel %vm152, %v545, %v547
    %556 = vst [vmem:[#allocation3 + $0x60] sm:$0xf0] %v548
    %557 = vst [vmem:[#allocation3 + $0x68] sm:$0xf0] %v549
    %558 = vst [vmem:[#allocation3 + $0x70] sm:$0xf0] %v550
    %559 = vst [vmem:[#allocation3 + $0x78] sm:$0xf0] %v551
    %v560 = vld [vmem:[#allocation2 + $0x4] sm:$0xff]
    %v561 = vld [vmem:[#allocation2 + $0xc] sm:$0xff]
    %v562 = vld [vmem:[#allocation2 + $0x14] sm:$0xf]
    %s563 = scalar_lea.vmem [#allocation7], 32
    %v564 = vld [vmem:[%s563] ss:$8 sm:$0xf]
    %v566 = vperm.slane %v564, 0
    %v567 = vperm.slane %v564, 1
    %v568 = vperm.slane %v564, 2
    %v569 = vperm.slane %v564, 3
    %v570 = vrot.slane %v567, 4
    %v571 = vrot.slane %v569, 4
    %v572 = vsel %vm77, %v566, %v570
    %v573 = vsel %vm77, %v568, %v571
    %574 = vrot.lane.b32.xlu0 %v572, 17
    %v575 = vpop.permute.xlu0 %574
    %576 = vrot.lane.b32.xlu0 %v573, 17
    %v577 = vpop.permute.xlu0 %576
    %v578 = vrot.slane %v575, 4
    %v579 = vrot.slane %v577, 4
    %v580 = vsel %vm119, %v578, %v575
    %v581 = vsel %vm77, %v578, %v579
    %v582 = vsel %vm119, %v581, %v577
    %v586 = vmul.f32 %v560, %v580
    %v587 = vmul.f32 %v561, %v582
    %v588 = vmul.f32 %v562, %v579
    %592 = vst [vmem:[#allocation1] ss:$2 sm:$0xff] %v586
    %s593 = scalar_lea.vmem [#allocation1], 16
    %594 = vst [vmem:[%s593] ss:$2 sm:$0xff] %v587
    %s595 = scalar_lea.vmem [#allocation1], 32
    %596 = vst [vmem:[%s595] ss:$2 sm:$0xff] %v588
    %v597 = vld.sshfl [vmem:[#allocation1] sm:$0xff pattern:$0x75316420]
    %v598 = vld.sshfl [vmem:[#allocation1 + $0x8] sm:$0xff pattern:$0x75316420]
    %v599 = vld.sshfl [vmem:[#allocation1 + $0x10] sm:$0xff pattern:$0x75316420]
    %v600 = vld.sshfl [vmem:[#allocation1 + $0x18] sm:$0xff pattern:$0x75316420]
    %v601 = vld.sshfl [vmem:[#allocation1 + $0x20] sm:$0xff pattern:$0x75316420]
    %602 = vrot.lane.b32.xlu0 %v597, 111
    %v603 = vpop.permute.xlu0 %602
    %604 = vrot.lane.b32.xlu0 %v598, 111
    %v605 = vpop.permute.xlu0 %604
    %606 = vrot.lane.b32.xlu0 %v599, 111
    %v607 = vpop.permute.xlu0 %606
    %608 = vrot.lane.b32.xlu0 %v600, 111
    %v609 = vpop.permute.xlu0 %608
    %610 = vrot.lane.b32.xlu0 %v601, 111
    %v611 = vpop.permute.xlu0 %610
    %v612 = vsel %vm86, %v603, %v605
    %v613 = vsel %vm86, %v605, %v607
    %v614 = vsel %vm86, %v607, %v609
    %v615 = vsel %vm86, %v609, %v611
    %620 = vst [vmem:[#allocation3 + $0x80] sm:$0xf] %v612
    %621 = vst [vmem:[#allocation3 + $0x88] sm:$0xf] %v613
    %622 = vst [vmem:[#allocation3 + $0x90] sm:$0xf] %v614
    %623 = vst [vmem:[#allocation3 + $0x98] sm:$0xf] %v615
    %v624 = vld [vmem:[%s1] sm:$0xf]
    %v625 = vld [vmem:[#allocation3] sm:$0xff]
    %v626 = vld [vmem:[#allocation3 + $0x8] sm:$0xff]
    %v627 = vld [vmem:[#allocation3 + $0x10] sm:$0xff]
    %v628 = vld [vmem:[#allocation3 + $0x18] sm:$0xff]
    %v629 = vld [vmem:[#allocation3 + $0x20] sm:$0xff]
    %v630 = vld [vmem:[#allocation3 + $0x28] sm:$0xff]
    %v631 = vld [vmem:[#allocation3 + $0x30] sm:$0xff]
    %v632 = vld [vmem:[#allocation3 + $0x38] sm:$0xff]
    %v633 = vld [vmem:[#allocation3 + $0x40] sm:$0xff]
    %v634 = vld [vmem:[#allocation3 + $0x48] sm:$0xff]
    %v635 = vld [vmem:[#allocation3 + $0x50] sm:$0xff]
    %v636 = vld [vmem:[#allocation3 + $0x58] sm:$0xff]
    %v637 = vld [vmem:[#allocation3 + $0x60] sm:$0xff]
    %v638 = vld [vmem:[#allocation3 + $0x68] sm:$0xff]
    %v639 = vld [vmem:[#allocation3 + $0x70] sm:$0xff]
    %v640 = vld [vmem:[#allocation3 + $0x78] sm:$0xff]
    %v641 = vld [vmem:[#allocation3 + $0x80] sm:$0xf]
    %v642 = vld [vmem:[#allocation3 + $0x88] sm:$0xf]
    %v643 = vld [vmem:[#allocation3 + $0x90] sm:$0xf]
    %v644 = vld [vmem:[#allocation3 + $0x98] sm:$0xf]
    %vm645 = vcmask 293888
    %v647 = vsel %vm645, %v624, 0
    %v650 = vsel %vm77, %v641, 0
    %v653 = vsel %vm77, %v642, 0
    %v656 = vsel %vm77, %v643, 0
    %v659 = vsel %vm77, %v644, 0
    %661 = vmatpush.msra.mxu0 0.0
    %662 = vmatpush.msra.mxu0 0.0
    %663 = vmatpush.msra.mxu0 0.0
    %664 = vmatpush.msra.mxu0 0.0
    %665 = vmatpush.msra.mxu0 0.0
    %666 = vmatpush.msra.mxu0 0.0
    %667 = vmatpush.msra.mxu0 0.0
    %668 = vmatpush.msra.mxu0 0.0
    %669 = vmatpush.msra.mxu0 0.0
    %670 = vmatpush.msra.mxu0 0.0
    %671 = vmatpush.msra.mxu0 0.0
    %672 = vmatpush.msra.mxu0 %v650
    %673 = vmatpush.msra.mxu0 %v637
    %674 = vmatpush.msra.mxu0 %v633
    %675 = vmatpush.msra.mxu0 %v629
    %676 = vmatpush.msra.mxu0 %v625
    %677 = vmatmul.f32.gmra.mxu0 %v647
    %v678 = vpop.f32.mrf.mxu0
    %v679 = vadd.f32 0.0, %v678
    %680 = vdwg.mxu0
    %681 = vmatpush.msra.mxu0 0.0
    %682 = vmatpush.msra.mxu0 0.0
    %683 = vmatpush.msra.mxu0 0.0
    %684 = vmatpush.msra.mxu0 0.0
    %685 = vmatpush.msra.mxu0 0.0
    %686 = vmatpush.msra.mxu0 0.0
    %687 = vmatpush.msra.mxu0 0.0
    %688 = vmatpush.msra.mxu0 0.0
    %689 = vmatpush.msra.mxu0 0.0
    %690 = vmatpush.msra.mxu0 0.0
    %691 = vmatpush.msra.mxu0 0.0
    %692 = vmatpush.msra.mxu0 %v653
    %693 = vmatpush.msra.mxu0 %v638
    %694 = vmatpush.msra.mxu0 %v634
    %695 = vmatpush.msra.mxu0 %v630
    %696 = vmatpush.msra.mxu0 %v626
    %697 = vmatmul.f32.gmra.mxu0 %v647
    %v698 = vpop.f32.mrf.mxu0
    %v699 = vadd.f32 0.0, %v698
    %700 = vdwg.mxu0
    %701 = vmatpush.msra.mxu0 0.0
    %702 = vmatpush.msra.mxu0 0.0
    %703 = vmatpush.msra.mxu0 0.0
    %704 = vmatpush.msra.mxu0 0.0
    %705 = vmatpush.msra.mxu0 0.0
    %706 = vmatpush.msra.mxu0 0.0
    %707 = vmatpush.msra.mxu0 0.0
    %708 = vmatpush.msra.mxu0 0.0
    %709 = vmatpush.msra.mxu0 0.0
    %710 = vmatpush.msra.mxu0 0.0
    %711 = vmatpush.msra.mxu0 0.0
    %712 = vmatpush.msra.mxu0 %v656
    %713 = vmatpush.msra.mxu0 %v639
    %714 = vmatpush.msra.mxu0 %v635
    %715 = vmatpush.msra.mxu0 %v631
    %716 = vmatpush.msra.mxu0 %v627
    %717 = vmatmul.f32.gmra.mxu0 %v647
    %v718 = vpop.f32.mrf.mxu0
    %v719 = vadd.f32 0.0, %v718
    %720 = vdwg.mxu0
    %721 = vmatpush.msra.mxu0 0.0
    %722 = vmatpush.msra.mxu0 0.0
    %723 = vmatpush.msra.mxu0 0.0
    %724 = vmatpush.msra.mxu0 0.0
    %725 = vmatpush.msra.mxu0 0.0
    %726 = vmatpush.msra.mxu0 0.0
    %727 = vmatpush.msra.mxu0 0.0
    %728 = vmatpush.msra.mxu0 0.0
    %729 = vmatpush.msra.mxu0 0.0
    %730 = vmatpush.msra.mxu0 0.0
    %731 = vmatpush.msra.mxu0 0.0
    %732 = vmatpush.msra.mxu0 %v659
    %733 = vmatpush.msra.mxu0 %v640
    %734 = vmatpush.msra.mxu0 %v636
    %735 = vmatpush.msra.mxu0 %v632
    %736 = vmatpush.msra.mxu0 %v628
    %737 = vmatmul.f32.gmra.mxu0 %v647
    %v738 = vpop.f32.mrf.mxu0
    %v739 = vadd.f32 0.0, %v738
    %740 = vdwg.mxu0
    %v741 = vsel %vm77, %v679, 0.0
    %v742 = vsel %vm77, %v699, 0.0
    %v743 = vadd.f32 %v741, %v742
    %v744 = vsel %vm77, %v719, 0.0
    %v745 = vadd.f32 %v743, %v744
    %v746 = vsel %vm77, %v739, 0.0
    %v747 = vadd.f32 %v745, %v746
    %748 = vadd.xlane.f32.xlu0 %v747
    %v749 = vpop.xlane.xlu0 %748
    %v750 = vmul.f32 %v749, 0.001953125
    %v751 = vmul.f32 %v679, %v679
    %v752 = vmul.f32 %v699, %v699
    %v753 = vmul.f32 %v719, %v719
    %v754 = vmul.f32 %v739, %v739
    %v755 = vsel %vm77, %v751, 0.0
    %v756 = vsel %vm77, %v752, 0.0
    %v757 = vadd.f32 %v755, %v756
    %v758 = vsel %vm77, %v753, 0.0
    %v759 = vadd.f32 %v757, %v758
    %v760 = vsel %vm77, %v754, 0.0
    %v761 = vadd.f32 %v759, %v760
    %762 = vadd.xlane.f32.xlu0 %v761
    %v763 = vpop.xlane.xlu0 %762
    %v764 = vmul.f32 %v763, 0.001953125
    %v765 = vmul.f32 %v750, %v750
    %v766 = vsub.f32 %v764, %v765
    %v767 = vld [vmem:[%s2] sm:$0xf]
    %v768 = vadd.f32 %v766, 1e-05
    %v769 = vrsqrt.pop %v768
    %v770 = vmul.f32 %v769, %v768
    %v771 = vmul.f32 %v770, %v769
    %v772 = vmul.f32 0.5, %v771
    %v773 = vsub.f32 1.5, %v772
    %v774 = vmul.f32 %v769, %v773
    %vm775 = vweird.f32 %v768
    %vm776 = vweird.f32 %v769
    %vm777 = vmor %vm775, %vm776
    %v778 = vsel %vm777, %v769, %v774
    %v779 = vmul.f32 %v767, %v778
    %781 = vset.pattern.permute.xlu0 0
    %782 = vperm.xlu0 %781, %v779
    %v783 = vpop.permute.xlu0 %782
    %v785 = vmul.f32 %v679, %v783
    %v786 = vmul.f32 %v699, %v783
    %v787 = vmul.f32 %v719, %v783
    %v788 = vmul.f32 %v739, %v783
    %v789 = vld [vmem:[%s3] sm:$0xf]
    %v790 = vmul.f32 %v750, %v779
    %v791 = vsub.f32 %v789, %v790
    %793 = vset.pattern.permute.xlu0 0
    %794 = vperm.xlu0 %793, %v791
    %v795 = vpop.permute.xlu0 %794
    %v797 = vadd.f32 %v785, %v795
    %v798 = vadd.f32 %v786, %v795
    %v799 = vadd.f32 %v787, %v795
    %v800 = vadd.f32 %v788, %v795
    %v801 = vmax.f32 %v797, 0.0
    %v802 = vmax.f32 %v798, 0.0
    %v803 = vmax.f32 %v799, 0.0
    %v804 = vmax.f32 %v800, 0.0
    %v809 = vrot.slane %v802, 4
    %v810 = vrot.slane %v804, 4
    %v811 = vsel %vm77, %v801, %v809
    %v812 = vsel %vm77, %v803, %v810
    %815 = vst [vmem:[#allocation2 + $0x4] sm:$0xff] %v811
    %816 = vst [vmem:[#allocation2 + $0xc] sm:$0xff] %v812
    %v817 = vld [vmem:[#allocation2] sm:$0xff]
    %v818 = vld [vmem:[#allocation2 + $0x8] sm:$0xff]
    %v819 = vld [vmem:[#allocation2 + $0x10] sm:$0xf]
    %v820 = vld [vmem:[#allocation7] ss:$8 sm:$0xf]
    %v822 = vperm.slane %v820, 0
    %v823 = vperm.slane %v820, 1
    %v824 = vperm.slane %v820, 2
    %v825 = vperm.slane %v820, 3
    %v826 = vrot.slane %v823, 4
    %v827 = vrot.slane %v825, 4
    %v828 = vsel %vm77, %v822, %v826
    %v829 = vsel %vm77, %v824, %v827
    %830 = vrot.lane.b32.xlu0 %v828, 111
    %v831 = vpop.permute.xlu0 %830
    %832 = vrot.lane.b32.xlu0 %v829, 111
    %v833 = vpop.permute.xlu0 %832
    %v834 = vrot.slane %v831, 4
    %v835 = vrot.slane %v833, 4
    %v836 = vsel %vm86, %v834, %v831
    %v837 = vsel %vm77, %v834, %v835
    %v838 = vsel %vm86, %v837, %v833
    %v842 = vmul.f32 %v817, %v836
    %v843 = vmul.f32 %v818, %v838
    %v844 = vmul.f32 %v819, %v835
    %848 = vst [vmem:[#allocation1] ss:$2 sm:$0xff] %v842
    %s849 = scalar_lea.vmem [#allocation1], 16
    %850 = vst [vmem:[%s849] ss:$2 sm:$0xff] %v843
    %s851 = scalar_lea.vmem [#allocation1], 32
    %852 = vst [vmem:[%s851] ss:$2 sm:$0xff] %v844
    %v853 = vld.sshfl [vmem:[#allocation1] sm:$0xff pattern:$0x75316420]
    %v854 = vld.sshfl [vmem:[#allocation1 + $0x8] sm:$0xff pattern:$0x75316420]
    %v855 = vld.sshfl [vmem:[#allocation1 + $0x10] sm:$0xff pattern:$0x75316420]
    %v856 = vld.sshfl [vmem:[#allocation1 + $0x18] sm:$0xff pattern:$0x75316420]
    %v857 = vld.sshfl [vmem:[#allocation1 + $0x20] sm:$0xff pattern:$0x75316420]
    %858 = vrot.lane.b32.xlu0 %v853, 17
    %v859 = vpop.permute.xlu0 %858
    %860 = vrot.lane.b32.xlu0 %v854, 17
    %v861 = vpop.permute.xlu0 %860
    %862 = vrot.lane.b32.xlu0 %v855, 17
    %v863 = vpop.permute.xlu0 %862
    %864 = vrot.lane.b32.xlu0 %v856, 17
    %v865 = vpop.permute.xlu0 %864
    %866 = vrot.lane.b32.xlu0 %v857, 17
    %v867 = vpop.permute.xlu0 %866
    %v868 = vsel %vm119, %v859, %v861
    %v869 = vsel %vm119, %v861, %v863
    %v870 = vsel %vm119, %v863, %v865
    %v871 = vsel %vm119, %v865, %v867
    %876 = vst [vmem:[#allocation3] sm:$0xf] %v868
    %877 = vst [vmem:[#allocation3 + $0x8] sm:$0xf] %v869
    %878 = vst [vmem:[#allocation3 + $0x10] sm:$0xf] %v870
    %879 = vst [vmem:[#allocation3 + $0x18] sm:$0xf] %v871
    %v880 = vld [vmem:[#allocation2] sm:$0xff]
    %v881 = vld [vmem:[#allocation2 + $0x8] sm:$0xff]
    %v882 = vld [vmem:[#allocation2 + $0x10] sm:$0xf]
    %v883 = vld [vmem:[%s135] ss:$8 sm:$0xf]
    %v885 = vperm.slane %v883, 0
    %v886 = vperm.slane %v883, 1
    %v887 = vperm.slane %v883, 2
    %v888 = vperm.slane %v883, 3
    %v889 = vrot.slane %v886, 4
    %v890 = vrot.slane %v888, 4
    %v891 = vsel %vm77, %v885, %v889
    %v892 = vsel %vm77, %v887, %v890
    %893 = vrot.lane.b32.xlu0 %v891, 112
    %v894 = vpop.permute.xlu0 %893
    %895 = vrot.lane.b32.xlu0 %v892, 112
    %v896 = vpop.permute.xlu0 %895
    %v897 = vrot.slane %v894, 4
    %v898 = vrot.slane %v896, 4
    %v899 = vsel %vm152, %v897, %v894
    %v900 = vsel %vm77, %v897, %v898
    %v901 = vsel %vm152, %v900, %v896
    %v905 = vmul.f32 %v880, %v899
    %v906 = vmul.f32 %v881, %v901
    %v907 = vmul.f32 %v882, %v898
    %s911 = scalar_lea.vmem [#allocation1], 1
    %912 = vst [vmem:[%s911] ss:$2 sm:$0xff] %v905
    %s913 = scalar_lea.vmem [#allocation1], 17
    %914 = vst [vmem:[%s913] ss:$2 sm:$0xff] %v906
    %s915 = scalar_lea.vmem [#allocation1], 33
    %916 = vst [vmem:[%s915] ss:$2 sm:$0xff] %v907
    %v917 = vld.sshfl [vmem:[#allocation1] sm:$0xff pattern:$0x75316420]
    %v918 = vld.sshfl [vmem:[#allocation1 + $0x8] sm:$0xff pattern:$0x75316420]
    %v919 = vld.sshfl [vmem:[#allocation1 + $0x10] sm:$0xff pattern:$0x75316420]
    %v920 = vld.sshfl [vmem:[#allocation1 + $0x18] sm:$0xff pattern:$0x75316420]
    %v921 = vld.sshfl [vmem:[#allocation1 + $0x20] sm:$0xff pattern:$0x75316420]
    %922 = vrot.lane.b32.xlu0 %v917, 16
    %v923 = vpop.permute.xlu0 %922
    %924 = vrot.lane.b32.xlu0 %v918, 16
    %v925 = vpop.permute.xlu0 %924
    %926 = vrot.lane.b32.xlu0 %v919, 16
    %v927 = vpop.permute.xlu0 %926
    %928 = vrot.lane.b32.xlu0 %v920, 16
    %v929 = vpop.permute.xlu0 %928
    %930 = vrot.lane.b32.xlu0 %v921, 16
    %v931 = vpop.permute.xlu0 %930
    %v932 = vsel %vm186, %v923, %v925
    %v933 = vsel %vm186, %v925, %v927
    %v934 = vsel %vm186, %v927, %v929
    %v935 = vsel %vm186, %v929, %v931
    %940 = vst [vmem:[#allocation3] sm:$0xf0] %v932
    %941 = vst [vmem:[#allocation3 + $0x8] sm:$0xf0] %v933
    %942 = vst [vmem:[#allocation3 + $0x10] sm:$0xf0] %v934
    %943 = vst [vmem:[#allocation3 + $0x18] sm:$0xf0] %v935
    %v944 = vld [vmem:[#allocation2] sm:$0xff]
    %v945 = vld [vmem:[#allocation2 + $0x8] sm:$0xff]
    %v946 = vld [vmem:[#allocation2 + $0x10] sm:$0xf]
    %v947 = vld [vmem:[%s202] ss:$8 sm:$0xf]
    %v949 = vperm.slane %v947, 0
    %v950 = vperm.slane %v947, 1
    %v951 = vperm.slane %v947, 2
    %v952 = vperm.slane %v947, 3
    %v953 = vrot.slane %v950, 4
    %v954 = vrot.slane %v952, 4
    %v955 = vsel %vm77, %v949, %v953
    %v956 = vsel %vm77, %v951, %v954
    %957 = vrot.lane.b32.xlu0 %v955, 113
    %v958 = vpop.permute.xlu0 %957
    %959 = vrot.lane.b32.xlu0 %v956, 113
    %v960 = vpop.permute.xlu0 %959
    %v961 = vrot.slane %v958, 4
    %v962 = vrot.slane %v960, 4
    %v963 = vsel %vm219, %v961, %v958
    %v964 = vsel %vm77, %v961, %v962
    %v965 = vsel %vm219, %v964, %v960
    %v969 = vmul.f32 %v944, %v963
    %v970 = vmul.f32 %v945, %v965
    %v971 = vmul.f32 %v946, %v962
    %975 = vst [vmem:[#allocation1] ss:$2 sm:$0xff] %v969
    %s976 = scalar_lea.vmem [#allocation1], 16
    %977 = vst [vmem:[%s976] ss:$2 sm:$0xff] %v970
    %s978 = scalar_lea.vmem [#allocation1], 32
    %979 = vst [vmem:[%s978] ss:$2 sm:$0xff] %v971
    %v980 = vld.sshfl [vmem:[#allocation1] sm:$0xff pattern:$0x75316420]
    %v981 = vld.sshfl [vmem:[#allocation1 + $0x8] sm:$0xff pattern:$0x75316420]
    %v982 = vld.sshfl [vmem:[#allocation1 + $0x10] sm:$0xff pattern:$0x75316420]
    %v983 = vld.sshfl [vmem:[#allocation1 + $0x18] sm:$0xff pattern:$0x75316420]
    %v984 = vld.sshfl [vmem:[#allocation1 + $0x20] sm:$0xff pattern:$0x75316420]
    %985 = vrot.lane.b32.xlu0 %v980, 15
    %v986 = vpop.permute.xlu0 %985
    %987 = vrot.lane.b32.xlu0 %v981, 15
    %v988 = vpop.permute.xlu0 %987
    %989 = vrot.lane.b32.xlu0 %v982, 15
    %v990 = vpop.permute.xlu0 %989
    %991 = vrot.lane.b32.xlu0 %v983, 15
    %v992 = vpop.permute.xlu0 %991
    %993 = vrot.lane.b32.xlu0 %v984, 15
    %v994 = vpop.permute.xlu0 %993
    %v995 = vsel %vm252, %v986, %v988
    %v996 = vsel %vm252, %v988, %v990
    %v997 = vsel %vm252, %v990, %v992
    %v998 = vsel %vm252, %v992, %v994
    %1003 = vst [vmem:[#allocation3 + $0x20] sm:$0xf] %v995
    %1004 = vst [vmem:[#allocation3 + $0x28] sm:$0xf] %v996
    %1005 = vst [vmem:[#allocation3 + $0x30] sm:$0xf] %v997
    %1006 = vst [vmem:[#allocation3 + $0x38] sm:$0xf] %v998
    %v1007 = vld [vmem:[#allocation2] sm:$0xff]
    %v1008 = vld [vmem:[#allocation2 + $0x8] sm:$0xff]
    %v1009 = vld [vmem:[#allocation2 + $0x10] sm:$0xf]
    %v1010 = vld [vmem:[%s268] ss:$8 sm:$0xf]
    %v1012 = vperm.slane %v1010, 0
    %v1013 = vperm.slane %v1010, 1
    %v1014 = vperm.slane %v1010, 2
    %v1015 = vperm.slane %v1010, 3
    %v1016 = vrot.slane %v1013, 4
    %v1017 = vrot.slane %v1015, 4
    %v1018 = vsel %vm77, %v1012, %v1016
    %v1019 = vsel %vm77, %v1014, %v1017
    %1020 = vrot.lane.b32.xlu0 %v1018, 127
    %v1021 = vpop.permute.xlu0 %1020
    %1022 = vrot.lane.b32.xlu0 %v1019, 127
    %v1023 = vpop.permute.xlu0 %1022
    %v1024 = vrot.slane %v1021, 4
    %v1025 = vrot.slane %v1023, 4
    %v1026 = vsel %vm285, %v1024, %v1021
    %v1027 = vsel %vm77, %v1024, %v1025
    %v1028 = vsel %vm285, %v1027, %v1023
    %v1032 = vmul.f32 %v1007, %v1026
    %v1033 = vmul.f32 %v1008, %v1028
    %v1034 = vmul.f32 %v1009, %v1025
    %s1038 = scalar_lea.vmem [#allocation1], 1
    %1039 = vst [vmem:[%s1038] ss:$2 sm:$0xff] %v1032
    %s1040 = scalar_lea.vmem [#allocation1], 17
    %1041 = vst [vmem:[%s1040] ss:$2 sm:$0xff] %v1033
    %s1042 = scalar_lea.vmem [#allocation1], 33
    %1043 = vst [vmem:[%s1042] ss:$2 sm:$0xff] %v1034
    %v1044 = vld.sshfl [vmem:[#allocation1] sm:$0xff pattern:$0x75316420]
    %v1045 = vld.sshfl [vmem:[#allocation1 + $0x8] sm:$0xff pattern:$0x75316420]
    %v1046 = vld.sshfl [vmem:[#allocation1 + $0x10] sm:$0xff pattern:$0x75316420]
    %v1047 = vld.sshfl [vmem:[#allocation1 + $0x18] sm:$0xff pattern:$0x75316420]
    %v1048 = vld.sshfl [vmem:[#allocation1 + $0x20] sm:$0xff pattern:$0x75316420]
    %1049 = vrot.lane.b32.xlu0 %v1044, 1
    %v1050 = vpop.permute.xlu0 %1049
    %1051 = vrot.lane.b32.xlu0 %v1045, 1
    %v1052 = vpop.permute.xlu0 %1051
    %1053 = vrot.lane.b32.xlu0 %v1046, 1
    %v1054 = vpop.permute.xlu0 %1053
    %1055 = vrot.lane.b32.xlu0 %v1047, 1
    %v1056 = vpop.permute.xlu0 %1055
    %1057 = vrot.lane.b32.xlu0 %v1048, 1
    %v1058 = vpop.permute.xlu0 %1057
    %v1059 = vsel %vm319, %v1050, %v1052
    %v1060 = vsel %vm319, %v1052, %v1054
    %v1061 = vsel %vm319, %v1054, %v1056
    %v1062 = vsel %vm319, %v1056, %v1058
    %1067 = vst [vmem:[#allocation3 + $0x20] sm:$0xf0] %v1059
    %1068 = vst [vmem:[#allocation3 + $0x28] sm:$0xf0] %v1060
    %1069 = vst [vmem:[#allocation3 + $0x30] sm:$0xf0] %v1061
    %1070 = vst [vmem:[#allocation3 + $0x38] sm:$0xf0] %v1062
    %v1071 = vld [vmem:[#allocation2 + $0x4] sm:$0xff]
    %v1072 = vld [vmem:[#allocation2 + $0xc] sm:$0xff]
    %v1073 = vld [vmem:[%s334] ss:$8 sm:$0xf]
    %v1075 = vperm.slane %v1073, 0
    %v1076 = vperm.slane %v1073, 1
    %v1077 = vperm.slane %v1073, 2
    %v1078 = vperm.slane %v1073, 3
    %v1079 = vrot.slane %v1076, 4
    %v1080 = vrot.slane %v1078, 4
    %v1081 = vsel %vm77, %v1075, %v1079
    %v1082 = vsel %vm77, %v1077, %v1080
    %v1085 = vmul.f32 %v1071, %v1081
    %v1086 = vmul.f32 %v1072, %v1082
    %1089 = vst [vmem:[#allocation1] ss:$2 sm:$0xff] %v1085
    %s1090 = scalar_lea.vmem [#allocation1], 16
    %1091 = vst [vmem:[%s1090] ss:$2 sm:$0xff] %v1086
    %v1092 = vld.sshfl [vmem:[#allocation1] sm:$0xff pattern:$0x75316420]
    %v1093 = vld.sshfl [vmem:[#allocation1 + $0x8] sm:$0xff pattern:$0x75316420]
    %v1094 = vld.sshfl [vmem:[#allocation1 + $0x10] sm:$0xff pattern:$0x75316420]
    %v1095 = vld.sshfl [vmem:[#allocation1 + $0x18] sm:$0xff pattern:$0x75316420]
    %1100 = vst [vmem:[#allocation3 + $0x40] sm:$0xf] %v1092
    %1101 = vst [vmem:[#allocation3 + $0x48] sm:$0xf] %v1093
    %1102 = vst [vmem:[#allocation3 + $0x50] sm:$0xf] %v1094
    %1103 = vst [vmem:[#allocation3 + $0x58] sm:$0xf] %v1095
    %v1104 = vld [vmem:[#allocation2 + $0x4] sm:$0xff]
    %v1105 = vld [vmem:[#allocation2 + $0xc] sm:$0xff]
    %v1106 = vld [vmem:[#allocation2 + $0x14] sm:$0xf]
    %v1107 = vld [vmem:[%s369] ss:$8 sm:$0xf]
    %v1109 = vperm.slane %v1107, 0
    %v1110 = vperm.slane %v1107, 1
    %v1111 = vperm.slane %v1107, 2
    %v1112 = vperm.slane %v1107, 3
    %v1113 = vrot.slane %v1110, 4
    %v1114 = vrot.slane %v1112, 4
    %v1115 = vsel %vm77, %v1109, %v1113
    %v1116 = vsel %vm77, %v1111, %v1114
    %1117 = vrot.lane.b32.xlu0 %v1115, 1
    %v1118 = vpop.permute.xlu0 %1117
    %1119 = vrot.lane.b32.xlu0 %v1116, 1
    %v1120 = vpop.permute.xlu0 %1119
    %v1121 = vrot.slane %v1118, 4
    %v1122 = vrot.slane %v1120, 4
    %v1123 = vsel %vm319, %v1121, %v1118
    %v1124 = vsel %vm77, %v1121, %v1122
    %v1125 = vsel %vm319, %v1124, %v1120
    %v1129 = vmul.f32 %v1104, %v1123
    %v1130 = vmul.f32 %v1105, %v1125
    %v1131 = vmul.f32 %v1106, %v1122
    %s1135 = scalar_lea.vmem [#allocation1], 1
    %1136 = vst [vmem:[%s1135] ss:$2 sm:$0xff] %v1129
    %s1137 = scalar_lea.vmem [#allocation1], 17
    %1138 = vst [vmem:[%s1137] ss:$2 sm:$0xff] %v1130
    %s1139 = scalar_lea.vmem [#allocation1], 33
    %1140 = vst [vmem:[%s1139] ss:$2 sm:$0xff] %v1131
    %v1141 = vld.sshfl [vmem:[#allocation1] sm:$0xff pattern:$0x75316420]
    %v1142 = vld.sshfl [vmem:[#allocation1 + $0x8] sm:$0xff pattern:$0x75316420]
    %v1143 = vld.sshfl [vmem:[#allocation1 + $0x10] sm:$0xff pattern:$0x75316420]
    %v1144 = vld.sshfl [vmem:[#allocation1 + $0x18] sm:$0xff pattern:$0x75316420]
    %v1145 = vld.sshfl [vmem:[#allocation1 + $0x20] sm:$0xff pattern:$0x75316420]
    %1146 = vrot.lane.b32.xlu0 %v1141, 127
    %v1147 = vpop.permute.xlu0 %1146
    %1148 = vrot.lane.b32.xlu0 %v1142, 127
    %v1149 = vpop.permute.xlu0 %1148
    %1150 = vrot.lane.b32.xlu0 %v1143, 127
    %v1151 = vpop.permute.xlu0 %1150
    %1152 = vrot.lane.b32.xlu0 %v1144, 127
    %v1153 = vpop.permute.xlu0 %1152
    %1154 = vrot.lane.b32.xlu0 %v1145, 127
    %v1155 = vpop.permute.xlu0 %1154
    %v1156 = vsel %vm285, %v1147, %v1149
    %v1157 = vsel %vm285, %v1149, %v1151
    %v1158 = vsel %vm285, %v1151, %v1153
    %v1159 = vsel %vm285, %v1153, %v1155
    %1164 = vst [vmem:[#allocation3 + $0x40] sm:$0xf0] %v1156
    %1165 = vst [vmem:[#allocation3 + $0x48] sm:$0xf0] %v1157
    %1166 = vst [vmem:[#allocation3 + $0x50] sm:$0xf0] %v1158
    %1167 = vst [vmem:[#allocation3 + $0x58] sm:$0xf0] %v1159
    %v1168 = vld [vmem:[#allocation2 + $0x4] sm:$0xff]
    %v1169 = vld [vmem:[#allocation2 + $0xc] sm:$0xff]
    %v1170 = vld [vmem:[#allocation2 + $0x14] sm:$0xf]
    %v1171 = vld [vmem:[%s434] ss:$8 sm:$0xf]
    %v1173 = vperm.slane %v1171, 0
    %v1174 = vperm.slane %v1171, 1
    %v1175 = vperm.slane %v1171, 2
    %v1176 = vperm.slane %v1171, 3
    %v1177 = vrot.slane %v1174, 4
    %v1178 = vrot.slane %v1176, 4
    %v1179 = vsel %vm77, %v1173, %v1177
    %v1180 = vsel %vm77, %v1175, %v1178
    %1181 = vrot.lane.b32.xlu0 %v1179, 15
    %v1182 = vpop.permute.xlu0 %1181
    %1183 = vrot.lane.b32.xlu0 %v1180, 15
    %v1184 = vpop.permute.xlu0 %1183
    %v1185 = vrot.slane %v1182, 4
    %v1186 = vrot.slane %v1184, 4
    %v1187 = vsel %vm252, %v1185, %v1182
    %v1188 = vsel %vm77, %v1185, %v1186
    %v1189 = vsel %vm252, %v1188, %v1184
    %v1193 = vmul.f32 %v1168, %v1187
    %v1194 = vmul.f32 %v1169, %v1189
    %v1195 = vmul.f32 %v1170, %v1186
    %1199 = vst [vmem:[#allocation1] ss:$2 sm:$0xff] %v1193
    %s1200 = scalar_lea.vmem [#allocation1], 16
    %1201 = vst [vmem:[%s1200] ss:$2 sm:$0xff] %v1194
    %s1202 = scalar_lea.vmem [#allocation1], 32
    %1203 = vst [vmem:[%s1202] ss:$2 sm:$0xff] %v1195
    %v1204 = vld.sshfl [vmem:[#allocation1] sm:$0xff pattern:$0x75316420]
    %v1205 = vld.sshfl [vmem:[#allocation1 + $0x8] sm:$0xff pattern:$0x75316420]
    %v1206 = vld.sshfl [vmem:[#allocation1 + $0x10] sm:$0xff pattern:$0x75316420]
    %v1207 = vld.sshfl [vmem:[#allocation1 + $0x18] sm:$0xff pattern:$0x75316420]
    %v1208 = vld.sshfl [vmem:[#allocation1 + $0x20] sm:$0xff pattern:$0x75316420]
    %1209 = vrot.lane.b32.xlu0 %v1204, 113
    %v1210 = vpop.permute.xlu0 %1209
    %1211 = vrot.lane.b32.xlu0 %v1205, 113
    %v1212 = vpop.permute.xlu0 %1211
    %1213 = vrot.lane.b32.xlu0 %v1206, 113
    %v1214 = vpop.permute.xlu0 %1213
    %1215 = vrot.lane.b32.xlu0 %v1207, 113
    %v1216 = vpop.permute.xlu0 %1215
    %1217 = vrot.lane.b32.xlu0 %v1208, 113
    %v1218 = vpop.permute.xlu0 %1217
    %v1219 = vsel %vm219, %v1210, %v1212
    %v1220 = vsel %vm219, %v1212, %v1214
    %v1221 = vsel %vm219, %v1214, %v1216
    %v1222 = vsel %vm219, %v1216, %v1218
    %1227 = vst [vmem:[#allocation3 + $0x60] sm:$0xf] %v1219
    %1228 = vst [vmem:[#allocation3 + $0x68] sm:$0xf] %v1220
    %1229 = vst [vmem:[#allocation3 + $0x70] sm:$0xf] %v1221
    %1230 = vst [vmem:[#allocation3 + $0x78] sm:$0xf] %v1222
    %v1231 = vld [vmem:[#allocation2 + $0x4] sm:$0xff]
    %v1232 = vld [vmem:[#allocation2 + $0xc] sm:$0xff]
    %v1233 = vld [vmem:[#allocation2 + $0x14] sm:$0xf]
    %v1234 = vld [vmem:[%s498] ss:$8 sm:$0xf]
    %v1236 = vperm.slane %v1234, 0
    %v1237 = vperm.slane %v1234, 1
    %v1238 = vperm.slane %v1234, 2
    %v1239 = vperm.slane %v1234, 3
    %v1240 = vrot.slane %v1237, 4
    %v1241 = vrot.slane %v1239, 4
    %v1242 = vsel %vm77, %v1236, %v1240
    %v1243 = vsel %vm77, %v1238, %v1241
    %1244 = vrot.lane.b32.xlu0 %v1242, 16
    %v1245 = vpop.permute.xlu0 %1244
    %1246 = vrot.lane.b32.xlu0 %v1243, 16
    %v1247 = vpop.permute.xlu0 %1246
    %v1248 = vrot.slane %v1245, 4
    %v1249 = vrot.slane %v1247, 4
    %v1250 = vsel %vm186, %v1248, %v1245
    %v1251 = vsel %vm77, %v1248, %v1249
    %v1252 = vsel %vm186, %v1251, %v1247
    %v1256 = vmul.f32 %v1231, %v1250
    %v1257 = vmul.f32 %v1232, %v1252
    %v1258 = vmul.f32 %v1233, %v1249
    %s1262 = scalar_lea.vmem [#allocation1], 1
    %1263 = vst [vmem:[%s1262] ss:$2 sm:$0xff] %v1256
    %s1264 = scalar_lea.vmem [#allocation1], 17
    %1265 = vst [vmem:[%s1264] ss:$2 sm:$0xff] %v1257
    %s1266 = scalar_lea.vmem [#allocation1], 33
    %1267 = vst [vmem:[%s1266] ss:$2 sm:$0xff] %v1258
    %v1268 = vld.sshfl [vmem:[#allocation1] sm:$0xff pattern:$0x75316420]
    %v1269 = vld.sshfl [vmem:[#allocation1 + $0x8] sm:$0xff pattern:$0x75316420]
    %v1270 = vld.sshfl [vmem:[#allocation1 + $0x10] sm:$0xff pattern:$0x75316420]
    %v1271 = vld.sshfl [vmem:[#allocation1 + $0x18] sm:$0xff pattern:$0x75316420]
    %v1272 = vld.sshfl [vmem:[#allocation1 + $0x20] sm:$0xff pattern:$0x75316420]
    %1273 = vrot.lane.b32.xlu0 %v1268, 112
    %v1274 = vpop.permute.xlu0 %1273
    %1275 = vrot.lane.b32.xlu0 %v1269, 112
    %v1276 = vpop.permute.xlu0 %1275
    %1277 = vrot.lane.b32.xlu0 %v1270, 112
    %v1278 = vpop.permute.xlu0 %1277
    %1279 = vrot.lane.b32.xlu0 %v1271, 112
    %v1280 = vpop.permute.xlu0 %1279
    %1281 = vrot.lane.b32.xlu0 %v1272, 112
    %v1282 = vpop.permute.xlu0 %1281
    %v1283 = vsel %vm152, %v1274, %v1276
    %v1284 = vsel %vm152, %v1276, %v1278
    %v1285 = vsel %vm152, %v1278, %v1280
    %v1286 = vsel %vm152, %v1280, %v1282
    %1291 = vst [vmem:[#allocation3 + $0x60] sm:$0xf0] %v1283
    %1292 = vst [vmem:[#allocation3 + $0x68] sm:$0xf0] %v1284
    %1293 = vst [vmem:[#allocation3 + $0x70] sm:$0xf0] %v1285
    %1294 = vst [vmem:[#allocation3 + $0x78] sm:$0xf0] %v1286
    %v1295 = vld [vmem:[#allocation2 + $0x4] sm:$0xff]
    %v1296 = vld [vmem:[#allocation2 + $0xc] sm:$0xff]
    %v1297 = vld [vmem:[#allocation2 + $0x14] sm:$0xf]
    %v1298 = vld [vmem:[%s563] ss:$8 sm:$0xf]
    %v1300 = vperm.slane %v1298, 0
    %v1301 = vperm.slane %v1298, 1
    %v1302 = vperm.slane %v1298, 2
    %v1303 = vperm.slane %v1298, 3
    %v1304 = vrot.slane %v1301, 4
    %v1305 = vrot.slane %v1303, 4
    %v1306 = vsel %vm77, %v1300, %v1304
    %v1307 = vsel %vm77, %v1302, %v1305
    %1308 = vrot.lane.b32.xlu0 %v1306, 17
    %v1309 = vpop.permute.xlu0 %1308
    %1310 = vrot.lane.b32.xlu0 %v1307, 17
    %v1311 = vpop.permute.xlu0 %1310
    %v1312 = vrot.slane %v1309, 4
    %v1313 = vrot.slane %v1311, 4
    %v1314 = vsel %vm119, %v1312, %v1309
    %v1315 = vsel %vm77, %v1312, %v1313
    %v1316 = vsel %vm119, %v1315, %v1311
    %v1320 = vmul.f32 %v1295, %v1314
    %v1321 = vmul.f32 %v1296, %v1316
    %v1322 = vmul.f32 %v1297, %v1313
    %1326 = vst [vmem:[#allocation1] ss:$2 sm:$0xff] %v1320
    %s1327 = scalar_lea.vmem [#allocation1], 16
    %1328 = vst [vmem:[%s1327] ss:$2 sm:$0xff] %v1321
    %s1329 = scalar_lea.vmem [#allocation1], 32
    %1330 = vst [vmem:[%s1329] ss:$2 sm:$0xff] %v1322
    %v1331 = vld.sshfl [vmem:[#allocation1] sm:$0xff pattern:$0x75316420]
    %v1332 = vld.sshfl [vmem:[#allocation1 + $0x8] sm:$0xff pattern:$0x75316420]
    %v1333 = vld.sshfl [vmem:[#allocation1 + $0x10] sm:$0xff pattern:$0x75316420]
    %v1334 = vld.sshfl [vmem:[#allocation1 + $0x18] sm:$0xff pattern:$0x75316420]
    %v1335 = vld.sshfl [vmem:[#allocation1 + $0x20] sm:$0xff pattern:$0x75316420]
    %1336 = vrot.lane.b32.xlu0 %v1331, 111
    %v1337 = vpop.permute.xlu0 %1336
    %1338 = vrot.lane.b32.xlu0 %v1332, 111
    %v1339 = vpop.permute.xlu0 %1338
    %1340 = vrot.lane.b32.xlu0 %v1333, 111
    %v1341 = vpop.permute.xlu0 %1340
    %1342 = vrot.lane.b32.xlu0 %v1334, 111
    %v1343 = vpop.permute.xlu0 %1342
    %1344 = vrot.lane.b32.xlu0 %v1335, 111
    %v1345 = vpop.permute.xlu0 %1344
    %v1346 = vsel %vm86, %v1337, %v1339
    %v1347 = vsel %vm86, %v1339, %v1341
    %v1348 = vsel %vm86, %v1341, %v1343
    %v1349 = vsel %vm86, %v1343, %v1345
    %1354 = vst [vmem:[#allocation3 + $0x80] sm:$0xf] %v1346
    %1355 = vst [vmem:[#allocation3 + $0x88] sm:$0xf] %v1347
    %1356 = vst [vmem:[#allocation3 + $0x90] sm:$0xf] %v1348
    %1357 = vst [vmem:[#allocation3 + $0x98] sm:$0xf] %v1349
    %v1358 = vld [vmem:[%s4] sm:$0xf]
    %v1359 = vld [vmem:[#allocation3] sm:$0xff]
    %v1360 = vld [vmem:[#allocation3 + $0x8] sm:$0xff]
    %v1361 = vld [vmem:[#allocation3 + $0x10] sm:$0xff]
    %v1362 = vld [vmem:[#allocation3 + $0x18] sm:$0xff]
    %v1363 = vld [vmem:[#allocation3 + $0x20] sm:$0xff]
    %v1364 = vld [vmem:[#allocation3 + $0x28] sm:$0xff]
    %v1365 = vld [vmem:[#allocation3 + $0x30] sm:$0xff]
    %v1366 = vld [vmem:[#allocation3 + $0x38] sm:$0xff]
    %v1367 = vld [vmem:[#allocation3 + $0x40] sm:$0xff]
    %v1368 = vld [vmem:[#allocation3 + $0x48] sm:$0xff]
    %v1369 = vld [vmem:[#allocation3 + $0x50] sm:$0xff]
    %v1370 = vld [vmem:[#allocation3 + $0x58] sm:$0xff]
    %v1371 = vld [vmem:[#allocation3 + $0x60] sm:$0xff]
    %v1372 = vld [vmem:[#allocation3 + $0x68] sm:$0xff]
    %v1373 = vld [vmem:[#allocation3 + $0x70] sm:$0xff]
    %v1374 = vld [vmem:[#allocation3 + $0x78] sm:$0xff]
    %v1375 = vld [vmem:[#allocation3 + $0x80] sm:$0xf]
    %v1376 = vld [vmem:[#allocation3 + $0x88] sm:$0xf]
    %v1377 = vld [vmem:[#allocation3 + $0x90] sm:$0xf]
    %v1378 = vld [vmem:[#allocation3 + $0x98] sm:$0xf]
    %v1380 = vsel %vm645, %v1358, 0
    %v1383 = vsel %vm77, %v1375, 0
    %v1386 = vsel %vm77, %v1376, 0
    %v1389 = vsel %vm77, %v1377, 0
    %v1392 = vsel %vm77, %v1378, 0
    %1394 = vmatpush.msra.mxu0 0.0
    %1395 = vmatpush.msra.mxu0 0.0
    %1396 = vmatpush.msra.mxu0 0.0
    %1397 = vmatpush.msra.mxu0 0.0
    %1398 = vmatpush.msra.mxu0 0.0
    %1399 = vmatpush.msra.mxu0 0.0
    %1400 = vmatpush.msra.mxu0 0.0
    %1401 = vmatpush.msra.mxu0 0.0
    %1402 = vmatpush.msra.mxu0 0.0
    %1403 = vmatpush.msra.mxu0 0.0
    %1404 = vmatpush.msra.mxu0 0.0
    %1405 = vmatpush.msra.mxu0 %v1383
    %1406 = vmatpush.msra.mxu0 %v1371
    %1407 = vmatpush.msra.mxu0 %v1367
    %1408 = vmatpush.msra.mxu0 %v1363
    %1409 = vmatpush.msra.mxu0 %v1359
    %1410 = vmatmul.f32.gmra.mxu0 %v1380
    %v1411 = vpop.f32.mrf.mxu0
    %v1412 = vadd.f32 0.0, %v1411
    %1413 = vdwg.mxu0
    %1414 = vmatpush.msra.mxu0 0.0
    %1415 = vmatpush.msra.mxu0 0.0
    %1416 = vmatpush.msra.mxu0 0.0
    %1417 = vmatpush.msra.mxu0 0.0
    %1418 = vmatpush.msra.mxu0 0.0
    %1419 = vmatpush.msra.mxu0 0.0
    %1420 = vmatpush.msra.mxu0 0.0
    %1421 = vmatpush.msra.mxu0 0.0
    %1422 = vmatpush.msra.mxu0 0.0
    %1423 = vmatpush.msra.mxu0 0.0
    %1424 = vmatpush.msra.mxu0 0.0
    %1425 = vmatpush.msra.mxu0 %v1386
    %1426 = vmatpush.msra.mxu0 %v1372
    %1427 = vmatpush.msra.mxu0 %v1368
    %1428 = vmatpush.msra.mxu0 %v1364
    %1429 = vmatpush.msra.mxu0 %v1360
    %1430 = vmatmul.f32.gmra.mxu0 %v1380
    %v1431 = vpop.f32.mrf.mxu0
    %v1432 = vadd.f32 0.0, %v1431
    %1433 = vdwg.mxu0
    %1434 = vmatpush.msra.mxu0 0.0
    %1435 = vmatpush.msra.mxu0 0.0
    %1436 = vmatpush.msra.mxu0 0.0
    %1437 = vmatpush.msra.mxu0 0.0
    %1438 = vmatpush.msra.mxu0 0.0
    %1439 = vmatpush.msra.mxu0 0.0
    %1440 = vmatpush.msra.mxu0 0.0
    %1441 = vmatpush.msra.mxu0 0.0
    %1442 = vmatpush.msra.mxu0 0.0
    %1443 = vmatpush.msra.mxu0 0.0
    %1444 = vmatpush.msra.mxu0 0.0
    %1445 = vmatpush.msra.mxu0 %v1389
    %1446 = vmatpush.msra.mxu0 %v1373
    %1447 = vmatpush.msra.mxu0 %v1369
    %1448 = vmatpush.msra.mxu0 %v1365
    %1449 = vmatpush.msra.mxu0 %v1361
    %1450 = vmatmul.f32.gmra.mxu0 %v1380
    %v1451 = vpop.f32.mrf.mxu0
    %v1452 = vadd.f32 0.0, %v1451
    %1453 = vdwg.mxu0
    %1454 = vmatpush.msra.mxu0 0.0
    %1455 = vmatpush.msra.mxu0 0.0
    %1456 = vmatpush.msra.mxu0 0.0
    %1457 = vmatpush.msra.mxu0 0.0
    %1458 = vmatpush.msra.mxu0 0.0
    %1459 = vmatpush.msra.mxu0 0.0
    %1460 = vmatpush.msra.mxu0 0.0
    %1461 = vmatpush.msra.mxu0 0.0
    %1462 = vmatpush.msra.mxu0 0.0
    %1463 = vmatpush.msra.mxu0 0.0
    %1464 = vmatpush.msra.mxu0 0.0
    %1465 = vmatpush.msra.mxu0 %v1392
    %1466 = vmatpush.msra.mxu0 %v1374
    %1467 = vmatpush.msra.mxu0 %v1370
    %1468 = vmatpush.msra.mxu0 %v1366
    %1469 = vmatpush.msra.mxu0 %v1362
    %1470 = vmatmul.f32.gmra.mxu0 %v1380
    %v1471 = vpop.f32.mrf.mxu0
    %v1472 = vadd.f32 0.0, %v1471
    %1473 = vdwg.mxu0
    %v1474 = vsel %vm77, %v1412, 0.0
    %v1475 = vsel %vm77, %v1432, 0.0
    %v1476 = vadd.f32 %v1474, %v1475
    %v1477 = vsel %vm77, %v1452, 0.0
    %v1478 = vadd.f32 %v1476, %v1477
    %v1479 = vsel %vm77, %v1472, 0.0
    %v1480 = vadd.f32 %v1478, %v1479
    %1481 = vadd.xlane.f32.xlu0 %v1480
    %v1482 = vpop.xlane.xlu0 %1481
    %v1483 = vmul.f32 %v1482, 0.001953125
    %v1484 = vmul.f32 %v1412, %v1412
    %v1485 = vmul.f32 %v1432, %v1432
    %v1486 = vmul.f32 %v1452, %v1452
    %v1487 = vmul.f32 %v1472, %v1472
    %v1488 = vsel %vm77, %v1484, 0.0
    %v1489 = vsel %vm77, %v1485, 0.0
    %v1490 = vadd.f32 %v1488, %v1489
    %v1491 = vsel %vm77, %v1486, 0.0
    %v1492 = vadd.f32 %v1490, %v1491
    %v1493 = vsel %vm77, %v1487, 0.0
    %v1494 = vadd.f32 %v1492, %v1493
    %1495 = vadd.xlane.f32.xlu0 %v1494
    %v1496 = vpop.xlane.xlu0 %1495
    %v1497 = vmul.f32 %v1496, 0.001953125
    %v1498 = vmul.f32 %v1483, %v1483
    %v1499 = vsub.f32 %v1497, %v1498
    %v1500 = vld [vmem:[%s5] sm:$0xf]
    %v1501 = vadd.f32 %v1499, 1e-05
    %v1502 = vrsqrt.pop %v1501
    %v1503 = vmul.f32 %v1502, %v1501
    %v1504 = vmul.f32 %v1503, %v1502
    %v1505 = vmul.f32 0.5, %v1504
    %v1506 = vsub.f32 1.5, %v1505
    %v1507 = vmul.f32 %v1502, %v1506
    %vm1508 = vweird.f32 %v1501
    %vm1509 = vweird.f32 %v1502
    %vm1510 = vmor %vm1508, %vm1509
    %v1511 = vsel %vm1510, %v1502, %v1507
    %v1512 = vmul.f32 %v1500, %v1511
    %1514 = vset.pattern.permute.xlu0 0
    %1515 = vperm.xlu0 %1514, %v1512
    %v1516 = vpop.permute.xlu0 %1515
    %v1518 = vmul.f32 %v1412, %v1516
    %v1519 = vmul.f32 %v1432, %v1516
    %v1520 = vmul.f32 %v1452, %v1516
    %v1521 = vmul.f32 %v1472, %v1516
    %v1522 = vld [vmem:[%s6] sm:$0xf]
    %v1523 = vmul.f32 %v1483, %v1512
    %v1524 = vsub.f32 %v1522, %v1523
    %1526 = vset.pattern.permute.xlu0 0
    %1527 = vperm.xlu0 %1526, %v1524
    %v1528 = vpop.permute.xlu0 %1527
    %v1530 = vadd.f32 %v1518, %v1528
    %v1531 = vadd.f32 %v1519, %v1528
    %v1532 = vadd.f32 %v1520, %v1528
    %v1533 = vadd.f32 %v1521, %v1528
    %v1534 = vld [vmem:[#allocation4] sm:$0xff]
    %v1535 = vld [vmem:[#allocation4 + $0x8] sm:$0xff]
    %1538 = vst [vmem:[#allocation1] ss:$2 sm:$0xff] %v1534
    %s1539 = scalar_lea.vmem [#allocation1], 16
    %1540 = vst [vmem:[%s1539] ss:$2 sm:$0xff] %v1535
    %v1541 = vld.sshfl [vmem:[#allocation1] sm:$0xff pattern:$0x75316420]
    %v1542 = vld.sshfl [vmem:[#allocation1 + $0x8] sm:$0xff pattern:$0x75316420]
    %v1543 = vld.sshfl [vmem:[#allocation1 + $0x10] sm:$0xff pattern:$0x75316420]
    %v1544 = vld.sshfl [vmem:[#allocation1 + $0x18] sm:$0xff pattern:$0x75316420]
    %v1549 = vadd.f32 %v1530, %v1541
    %v1550 = vadd.f32 %v1531, %v1542
    %v1551 = vadd.f32 %v1532, %v1543
    %v1552 = vadd.f32 %v1533, %v1544
    %v1553 = vmax.f32 %v1549, 0.0
    %v1554 = vmax.f32 %v1550, 0.0
    %v1555 = vmax.f32 %v1551, 0.0
    %v1556 = vmax.f32 %v1552, 0.0
    %v1561 = vrot.slane %v1554, 4
    %v1562 = vrot.slane %v1556, 4
    %v1563 = vsel %vm77, %v1553, %v1561
    %v1564 = vsel %vm77, %v1555, %v1562
    %1567 = vst [vmem:[#allocation9] sm:$0xff] %v1563
    %1568 = vst [vmem:[#allocation9 + $0x8] sm:$0xff] %v1564
    // Predicated region
    $region42: #{tpu_custom_call.1} parent=1 // pred_check
      _
    $region43: #{tpu_custom_call.1} parent=1 // pred_check_branch
      %1570 = sbr.rel (0) target = $region45
    $region44: #{tpu_custom_call.1} parent=1 // pred_region
      %1572 = vsyncadd [#allocation6], 0
      %s1574 = sshll.u32 [#allocation9], 4
      %s1575 = int_to_ptr.vmem [resolvable:$true] %s1574
      %s1576 = sshll.u32 %s8, 4
      %s1577 = int_to_ptr.hbm [resolvable:$true] %s1576
      %1579 = dma.vmem_to_hbm [thread:$0]  %s1575, 256, %s1577, [#allocation6]
    $region45: #{tpu_custom_call.1} parent=1 // pred_fallthru
      _
    // Predicated region
    $region46: #{tpu_custom_call.1} parent=1 // pred_check
      _
    $region47: #{tpu_custom_call.1} parent=1 // pred_check_branch
      %1581 = sbr.rel (0) target = $region49
    $region48: #{tpu_custom_call.1} parent=1 // pred_region
      %1583 = dma.done [#allocation6], 256
    $region49: #{tpu_custom_call.1} parent=1 // pred_fallthru
      _
    %1584 = vsyncpa [#allocation5], 1
    %1585 = vsyncpa [#allocation8], 1
    %1586 = vsyncpa [#allocation6], 1

</llo_original>
